<compile_context>
chip_gen: v7x
topology: tpu7x:2x2x1
jax: 0.10.0
libtpu: 0.0.40
codegen_flags: <defaults>
</compile_context>

<pallas_src>
import jax
import jax.numpy as jnp
from jax.experimental import pallas as pl
from jax.experimental.pallas import tpu as pltpu


def _text_prenet_kernel(x_ref, wpre_ref, bpre_ref, convw_ref, scale_ref,
                        shift_ref, wpost_ref, bpost_ref, out_ref):
    # x_ref     : (1, T, D2)      one batch element, channels-last
    # wpre_ref  : (D2, D2)        preprojection weight (already transposed: y = x @ W)
    # bpre_ref  : (1, D2)
    # convw_ref : (L*K, D2, D2)   per-layer, per-tap (C_in, C_out) matrices
    # scale_ref : (L, 1, D2)      folded eval-mode BatchNorm scale
    # shift_ref : (L, 1, D2)      folded conv-bias + BatchNorm shift
    # wpost_ref : (D2, E)         postprojection weight (transposed)
    # bpost_ref : (1, E)
    # out_ref   : (1, T, E)
    T = x_ref.shape[1]
    n_layers = scale_ref.shape[0]
    n_taps = convw_ref.shape[0] // n_layers          # kernel_size (3), pad = (k-1)/2
    pad = (n_taps - 1) // 2

    x = x_ref[0]                                     # (T, D2)
    h = jnp.dot(x, wpre_ref[...], preferred_element_type=jnp.float32) + bpre_ref[...]

    # row index, used to zero the wrapped-around rows after a sublane rotate
    row = jax.lax.broadcasted_iota(jnp.int32, (T, 1), 0)

    for layer in range(n_layers):                    # static unroll (3 layers)
        base = layer * n_taps
        y = None
        for tap in range(n_taps):                    # static unroll (3 taps)
            off = tap - pad                          # want h_s[t] = h[t + off]
            if off == 0:
                h_s = h
            else:
                rolled = pltpu.roll(h, shift=(-off) % T, axis=0)  # rolled[t] = h[t+off] (wrapped)
                if off < 0:
                    h_s = jnp.where(row < -off, 0.0, rolled)      # zero-pad left edge
                else:
                    h_s = jnp.where(row >= T - off, 0.0, rolled)  # zero-pad right edge
            part = jnp.dot(h_s, convw_ref[base + tap],
                           preferred_element_type=jnp.float32)
            y = part if y is None else y + part
        # conv-bias + BatchNorm1d (eval-mode running stats, pre-folded) + ReLU
        h = jnp.maximum(y * scale_ref[layer] + shift_ref[layer], 0.0)
        # TODO(synk): F.dropout(p=0.5, training=True) and batch-statistic BN are
        # omitted; this implements the eval()-mode forward pass.

    out = jnp.dot(h, wpost_ref[...], preferred_element_type=jnp.float32) + bpost_ref[...]
    out_ref[0] = out.astype(out_ref.dtype)


def text_prenet_forward(x, params, eps=1e-5):
    """Pallas equivalent of TextPrenet.forward (eval mode).

    x: (B, T, 2*E) float32, channels-last.
    returns: (B, T, E) float32.
    """
    B, T, D2 = x.shape
    E = params["w_post"].shape[0]
    L = len(params["conv_w"])
    K = params["conv_w"][0].shape[-1]

    # Parameter plumbing (tiny, O(C) work): transpose Linear/Conv weights so the
    # kernel does plain `x @ W` MXU matmuls, and fold conv bias + eval-mode BN
    # into a single per-channel scale/shift.
    w_pre_t = jnp.transpose(params["w_pre"])                       # (D2, D2)
    b_pre = params["b_pre"].reshape(1, D2)
    conv_w_t = jnp.stack(
        [jnp.transpose(params["conv_w"][l][:, :, k])               # (C_in, C_out)
         for l in range(L) for k in range(K)], axis=0)             # (L*K, D2, D2)
    bn_s = [params["bn_gamma"][l] / jnp.sqrt(params["bn_var"][l] + eps) for l in range(L)]
    scale = jnp.stack(bn_s, axis=0).reshape(L, 1, D2)
    shift = jnp.stack(
        [(params["conv_b"][l] - params["bn_mean"][l]) * bn_s[l] + params["bn_beta"][l]
         for l in range(L)], axis=0).reshape(L, 1, D2)
    w_post_t = jnp.transpose(params["w_post"])                     # (D2, E)
    b_post = params["b_post"].reshape(1, E)

    # Grid over batch only; each step consumes the whole (T, D2) sequence so the
    # k=3 convolutions need no cross-tile halo. Weights use constant block
    # indices -> fetched once, resident in VMEM across the grid.
    # TODO(synk): for very long T, tile the time axis with a 3-row halo per conv
    # layer and re-derive the VMEM budget for v7x (64 MiB/TC).
    out = pl.pallas_call(
        _text_prenet_kernel,
        out_shape=jax.ShapeDtypeStruct((B, T, E), jnp.float32),
        grid_spec=pltpu.PrefetchScalarGridSpec(
            num_scalar_prefetch=0,
            grid=(B,),
            in_specs=[
                pl.BlockSpec((1, T, D2), lambda b: (b, 0, 0)),       # x, per batch
                pl.BlockSpec((D2, D2), lambda b: (0, 0)),            # preprojection W^T
                pl.BlockSpec((1, D2), lambda b: (0, 0)),             # preprojection bias
                pl.BlockSpec((L * K, D2, D2), lambda b: (0, 0, 0)),  # conv tap matrices
                pl.BlockSpec((L, 1, D2), lambda b: (0, 0, 0)),       # folded BN scale
                pl.BlockSpec((L, 1, D2), lambda b: (0, 0, 0)),       # folded BN shift
                pl.BlockSpec((D2, E), lambda b: (0, 0)),             # postprojection W^T
                pl.BlockSpec((1, E), lambda b: (0, 0)),              # postprojection bias
            ],
            out_specs=pl.BlockSpec((1, T, E), lambda b: (b, 0, 0)),  # lane-dense (E % 128 == 0)
        ),
        compiler_params=pltpu.CompilerParams(
            dimension_semantics=("parallel",),
        ),
    )(x, w_pre_t, b_pre, conv_w_t, scale, shift, w_post_t, b_post)
    return out


def init_params(key, E, L=3, K=3, w_scale=0.05):
    """Deterministic parameter set mirroring the module's layer shapes."""
    D2 = 2 * E
    ks = jax.random.split(key, 4 + 6 * L)
    params = {
        "w_pre": jax.random.normal(ks[0], (D2, D2), jnp.float32) * w_scale,
        "b_pre": jax.random.normal(ks[1], (D2,), jnp.float32) * w_scale,
        "conv_w": [], "conv_b": [],
        "bn_gamma": [], "bn_beta": [], "bn_mean": [], "bn_var": [],
        "w_post": jax.random.normal(ks[2], (E, D2), jnp.float32) * w_scale,
        "b_post": jax.random.normal(ks[3], (E,), jnp.float32) * w_scale,
    }
    for l in range(L):
        o = 4 + 6 * l
        params["conv_w"].append(jax.random.normal(ks[o + 0], (D2, D2, K), jnp.float32) * w_scale)
        params["conv_b"].append(jax.random.normal(ks[o + 1], (D2,), jnp.float32) * w_scale)
        params["bn_gamma"].append(jax.random.uniform(ks[o + 2], (D2,), jnp.float32, 0.8, 1.2))
        params["bn_beta"].append(jax.random.normal(ks[o + 3], (D2,), jnp.float32) * w_scale)
        params["bn_mean"].append(jax.random.normal(ks[o + 4], (D2,), jnp.float32) * w_scale)
        params["bn_var"].append(jax.random.uniform(ks[o + 5], (D2,), jnp.float32, 0.5, 1.5))
    return params


def _reference(x, params, eps=1e-5):
    """Pure-JAX eval-mode TextPrenet forward (matches the PyTorch module)."""
    P = jax.lax.Precision.HIGHEST
    h = jnp.einsum("btc,dc->btd", x, params["w_pre"], precision=P) + params["b_pre"]
    T = x.shape[1]
    for l in range(len(params["conv_w"])):
        W = params["conv_w"][l]                       # (C_out, C_in, K)
        K = W.shape[-1]
        pad = (K - 1) // 2
        hp = jnp.pad(h, ((0, 0), (pad, pad), (0, 0)))
        y = params["conv_b"][l]
        for k in range(K):
            y = y + jnp.einsum("btc,dc->btd", hp[:, k:k + T, :], W[:, :, k], precision=P)
        y = (y - params["bn_mean"][l]) / jnp.sqrt(params["bn_var"][l] + eps) \
            * params["bn_gamma"][l] + params["bn_beta"][l]
        h = jnp.maximum(y, 0.0)                       # dropout is identity in eval mode
    return jnp.einsum("btc,dc->btd", h, params["w_post"], precision=P) + params["b_post"]


if __name__ == "__main__":
    key = jax.random.PRNGKey(0)
    k_x, k_p = jax.random.split(key)

    # Small but lane-aligned shapes: encoder_embedding_dim=128 (module default is
    # 256), so the conv/linear channel dim is 2*E = 256 and the output dim is 128
    # -> all last dims are multiples of 128 (lane-dense stores).
    B, T, E = 2, 16, 128
    D2 = 2 * E

    params = init_params(k_p, E, L=3, K=3)
    x = jax.random.normal(k_x, (B, T, D2), jnp.float32)

    out = text_prenet_forward(x, params)
    out = jax.block_until_ready(out)

    ref = _reference(x, params)

    assert out.shape == (B, T, E), out.shape
    assert out.dtype == jnp.float32, out.dtype
    assert bool(jnp.all(jnp.isfinite(out)))
    assert jnp.allclose(out, ref, atol=1e-3, rtol=1e-3), float(jnp.max(jnp.abs(out - ref)))

    print("KERNEL_OK")
</pallas_src>

<mosaic_0001>
module attributes {stable_mosaic.version = 11 : i64} {
  func.func @_text_prenet_kernel(%arg0: i32, %arg1: memref<1x16x256xf32, #tpu.memory_space<vmem>>, %arg2: memref<256x256xf32, #tpu.memory_space<vmem>>, %arg3: memref<1x256xf32, #tpu.memory_space<vmem>>, %arg4: memref<9x256x256xf32, #tpu.memory_space<vmem>>, %arg5: memref<3x1x256xf32, #tpu.memory_space<vmem>>, %arg6: memref<3x1x256xf32, #tpu.memory_space<vmem>>, %arg7: memref<256x128xf32, #tpu.memory_space<vmem>>, %arg8: memref<1x128xf32, #tpu.memory_space<vmem>>, %arg9: memref<1x16x128xf32, #tpu.memory_space<vmem>>) attributes {dimension_semantics = [#tpu.dimension_semantics<parallel>], iteration_bounds = array<i64: 2>, scalar_prefetch = 0 : i64, scratch_operands = 0 : i64, tpu.core_type = #tpu.core_type<tc>, window_params = [{transform_indices = @transform_0, window_bounds = array<i64: 1, 16, 256>}, {pipeline_mode = #tpu.pipeline_mode<synchronous>, transform_indices = @transform_1, window_bounds = array<i64: 256, 256>}, {pipeline_mode = #tpu.pipeline_mode<synchronous>, transform_indices = @transform_2, window_bounds = array<i64: 1, 256>}, {pipeline_mode = #tpu.pipeline_mode<synchronous>, transform_indices = @transform_3, window_bounds = array<i64: 9, 256, 256>}, {pipeline_mode = #tpu.pipeline_mode<synchronous>, transform_indices = @transform_4, window_bounds = array<i64: 3, 1, 256>}, {pipeline_mode = #tpu.pipeline_mode<synchronous>, transform_indices = @transform_5, window_bounds = array<i64: 3, 1, 256>}, {pipeline_mode = #tpu.pipeline_mode<synchronous>, transform_indices = @transform_6, window_bounds = array<i64: 256, 128>}, {pipeline_mode = #tpu.pipeline_mode<synchronous>, transform_indices = @transform_7, window_bounds = array<i64: 1, 128>}, {transform_indices = @transform_8, window_bounds = array<i64: 1, 16, 128>}]} {
    %c0 = arith.constant 0 : index
    %c0_0 = arith.constant 0 : index
    %c0_1 = arith.constant 0 : index
    %0 = vector.load %arg1[%c0, %c0_0, %c0_1] : memref<1x16x256xf32, #tpu.memory_space<vmem>>, vector<1x16x256xf32>
    %1 = vector.shape_cast %0 : vector<1x16x256xf32> to vector<16x256xf32>
    %c0_2 = arith.constant 0 : index
    %c0_3 = arith.constant 0 : index
    %2 = vector.load %arg2[%c0_2, %c0_3] : memref<256x256xf32, #tpu.memory_space<vmem>>, vector<256x256xf32>
    %cst = arith.constant dense<0.000000e+00> : vector<16x256xf32>
    %3 = tpu.matmul %1, %2, %cst {dimension_numbers = #tpu.dot_dimension_numbers<[1], [0], [0], [1], [0, 0, 1, 1], [], []>} : vector<16x256xf32>, vector<256x256xf32>, vector<16x256xf32> -> vector<16x256xf32>
    %c0_4 = arith.constant 0 : index
    %c0_5 = arith.constant 0 : index
    %4 = vector.load %arg3[%c0_4, %c0_5] : memref<1x256xf32, #tpu.memory_space<vmem>>, vector<1x256xf32>
    %5 = vector.broadcast %4 : vector<1x256xf32> to vector<16x256xf32>
    %6 = arith.addf %3, %5 : vector<16x256xf32>
    %7 = tpu.iota {dimensions = array<i32: 0>} : vector<16x1xi32>
    %c1_i32 = arith.constant 1 : i32
    %8 = tpu.dynamic_rotate %6 by %c1_i32 dim 0 : vector<16x256xf32>, i32 -> vector<16x256xf32>
    %c1_i32_6 = arith.constant 1 : i32
    %9 = vector.broadcast %c1_i32_6 : i32 to vector<16x1xi32>
    %10 = arith.cmpi slt, %7, %9 : vector<16x1xi32>
    %cst_7 = arith.constant 0.000000e+00 : f32
    %11 = vector.shape_cast %10 : vector<16x1xi1> to vector<16x1xi1>
    %12 = vector.broadcast %11 : vector<16x1xi1> to vector<16x256xi1>
    %13 = vector.broadcast %cst_7 : f32 to vector<16x256xf32>
    %14 = arith.select %12, %13, %8 : vector<16x256xi1>, vector<16x256xf32>
    %c0_8 = arith.constant 0 : index
    %c0_9 = arith.constant 0 : index
    %c0_10 = arith.constant 0 : index
    %15 = vector.load %arg4[%c0_8, %c0_9, %c0_10] : memref<9x256x256xf32, #tpu.memory_space<vmem>>, vector<1x256x256xf32>
    %16 = vector.shape_cast %15 : vector<1x256x256xf32> to vector<256x256xf32>
    %cst_11 = arith.constant dense<0.000000e+00> : vector<16x256xf32>
    %17 = tpu.matmul %14, %16, %cst_11 {dimension_numbers = #tpu.dot_dimension_numbers<[1], [0], [0], [1], [0, 0, 1, 1], [], []>} : vector<16x256xf32>, vector<256x256xf32>, vector<16x256xf32> -> vector<16x256xf32>
    %c1 = arith.constant 1 : index
    %c0_12 = arith.constant 0 : index
    %c0_13 = arith.constant 0 : index
    %18 = vector.load %arg4[%c1, %c0_12, %c0_13] : memref<9x256x256xf32, #tpu.memory_space<vmem>>, vector<1x256x256xf32>
    %19 = vector.shape_cast %18 : vector<1x256x256xf32> to vector<256x256xf32>
    %cst_14 = arith.constant dense<0.000000e+00> : vector<16x256xf32>
    %20 = tpu.matmul %6, %19, %cst_14 {dimension_numbers = #tpu.dot_dimension_numbers<[1], [0], [0], [1], [0, 0, 1, 1], [], []>} : vector<16x256xf32>, vector<256x256xf32>, vector<16x256xf32> -> vector<16x256xf32>
    %21 = arith.addf %17, %20 : vector<16x256xf32>
    %c15_i32 = arith.constant 15 : i32
    %22 = tpu.dynamic_rotate %6 by %c15_i32 dim 0 : vector<16x256xf32>, i32 -> vector<16x256xf32>
    %c15_i32_15 = arith.constant 15 : i32
    %23 = vector.broadcast %c15_i32_15 : i32 to vector<16x1xi32>
    %24 = arith.cmpi sge, %7, %23 : vector<16x1xi32>
    %cst_16 = arith.constant 0.000000e+00 : f32
    %25 = vector.shape_cast %24 : vector<16x1xi1> to vector<16x1xi1>
    %26 = vector.broadcast %25 : vector<16x1xi1> to vector<16x256xi1>
    %27 = vector.broadcast %cst_16 : f32 to vector<16x256xf32>
    %28 = arith.select %26, %27, %22 : vector<16x256xi1>, vector<16x256xf32>
    %c2 = arith.constant 2 : index
    %c0_17 = arith.constant 0 : index
    %c0_18 = arith.constant 0 : index
    %29 = vector.load %arg4[%c2, %c0_17, %c0_18] : memref<9x256x256xf32, #tpu.memory_space<vmem>>, vector<1x256x256xf32>
    %30 = vector.shape_cast %29 : vector<1x256x256xf32> to vector<256x256xf32>
    %cst_19 = arith.constant dense<0.000000e+00> : vector<16x256xf32>
    %31 = tpu.matmul %28, %30, %cst_19 {dimension_numbers = #tpu.dot_dimension_numbers<[1], [0], [0], [1], [0, 0, 1, 1], [], []>} : vector<16x256xf32>, vector<256x256xf32>, vector<16x256xf32> -> vector<16x256xf32>
    %32 = arith.addf %21, %31 : vector<16x256xf32>
    %c0_20 = arith.constant 0 : index
    %c0_21 = arith.constant 0 : index
    %c0_22 = arith.constant 0 : index
    %33 = vector.load %arg5[%c0_20, %c0_21, %c0_22] : memref<3x1x256xf32, #tpu.memory_space<vmem>>, vector<1x1x256xf32>
    %34 = vector.shape_cast %33 : vector<1x1x256xf32> to vector<1x256xf32>
    %35 = vector.broadcast %34 : vector<1x256xf32> to vector<16x256xf32>
    %36 = arith.mulf %32, %35 : vector<16x256xf32>
    %c0_23 = arith.constant 0 : index
    %c0_24 = arith.constant 0 : index
    %c0_25 = arith.constant 0 : index
    %37 = vector.load %arg6[%c0_23, %c0_24, %c0_25] : memref<3x1x256xf32, #tpu.memory_space<vmem>>, vector<1x1x256xf32>
    %38 = vector.shape_cast %37 : vector<1x1x256xf32> to vector<1x256xf32>
    %39 = vector.broadcast %38 : vector<1x256xf32> to vector<16x256xf32>
    %40 = arith.addf %36, %39 : vector<16x256xf32>
    %cst_26 = arith.constant 0.000000e+00 : f32
    %41 = vector.broadcast %cst_26 : f32 to vector<16x256xf32>
    %42 = arith.maximumf %40, %41 : vector<16x256xf32>
    %c1_i32_27 = arith.constant 1 : i32
    %43 = tpu.dynamic_rotate %42 by %c1_i32_27 dim 0 : vector<16x256xf32>, i32 -> vector<16x256xf32>
    %c1_i32_28 = arith.constant 1 : i32
    %44 = vector.broadcast %c1_i32_28 : i32 to vector<16x1xi32>
    %45 = arith.cmpi slt, %7, %44 : vector<16x1xi32>
    %cst_29 = arith.constant 0.000000e+00 : f32
    %46 = vector.shape_cast %45 : vector<16x1xi1> to vector<16x1xi1>
    %47 = vector.broadcast %46 : vector<16x1xi1> to vector<16x256xi1>
    %48 = vector.broadcast %cst_29 : f32 to vector<16x256xf32>
    %49 = arith.select %47, %48, %43 : vector<16x256xi1>, vector<16x256xf32>
    %c3 = arith.constant 3 : index
    %c0_30 = arith.constant 0 : index
    %c0_31 = arith.constant 0 : index
    %50 = vector.load %arg4[%c3, %c0_30, %c0_31] : memref<9x256x256xf32, #tpu.memory_space<vmem>>, vector<1x256x256xf32>
    %51 = vector.shape_cast %50 : vector<1x256x256xf32> to vector<256x256xf32>
    %cst_32 = arith.constant dense<0.000000e+00> : vector<16x256xf32>
    %52 = tpu.matmul %49, %51, %cst_32 {dimension_numbers = #tpu.dot_dimension_numbers<[1], [0], [0], [1], [0, 0, 1, 1], [], []>} : vector<16x256xf32>, vector<256x256xf32>, vector<16x256xf32> -> vector<16x256xf32>
    %c4 = arith.constant 4 : index
    %c0_33 = arith.constant 0 : index
    %c0_34 = arith.constant 0 : index
    %53 = vector.load %arg4[%c4, %c0_33, %c0_34] : memref<9x256x256xf32, #tpu.memory_space<vmem>>, vector<1x256x256xf32>
    %54 = vector.shape_cast %53 : vector<1x256x256xf32> to vector<256x256xf32>
    %cst_35 = arith.constant dense<0.000000e+00> : vector<16x256xf32>
    %55 = tpu.matmul %42, %54, %cst_35 {dimension_numbers = #tpu.dot_dimension_numbers<[1], [0], [0], [1], [0, 0, 1, 1], [], []>} : vector<16x256xf32>, vector<256x256xf32>, vector<16x256xf32> -> vector<16x256xf32>
    %56 = arith.addf %52, %55 : vector<16x256xf32>
    %c15_i32_36 = arith.constant 15 : i32
    %57 = tpu.dynamic_rotate %42 by %c15_i32_36 dim 0 : vector<16x256xf32>, i32 -> vector<16x256xf32>
    %c15_i32_37 = arith.constant 15 : i32
    %58 = vector.broadcast %c15_i32_37 : i32 to vector<16x1xi32>
    %59 = arith.cmpi sge, %7, %58 : vector<16x1xi32>
    %cst_38 = arith.constant 0.000000e+00 : f32
    %60 = vector.shape_cast %59 : vector<16x1xi1> to vector<16x1xi1>
    %61 = vector.broadcast %60 : vector<16x1xi1> to vector<16x256xi1>
    %62 = vector.broadcast %cst_38 : f32 to vector<16x256xf32>
    %63 = arith.select %61, %62, %57 : vector<16x256xi1>, vector<16x256xf32>
    %c5 = arith.constant 5 : index
    %c0_39 = arith.constant 0 : index
    %c0_40 = arith.constant 0 : index
    %64 = vector.load %arg4[%c5, %c0_39, %c0_40] : memref<9x256x256xf32, #tpu.memory_space<vmem>>, vector<1x256x256xf32>
    %65 = vector.shape_cast %64 : vector<1x256x256xf32> to vector<256x256xf32>
    %cst_41 = arith.constant dense<0.000000e+00> : vector<16x256xf32>
    %66 = tpu.matmul %63, %65, %cst_41 {dimension_numbers = #tpu.dot_dimension_numbers<[1], [0], [0], [1], [0, 0, 1, 1], [], []>} : vector<16x256xf32>, vector<256x256xf32>, vector<16x256xf32> -> vector<16x256xf32>
    %67 = arith.addf %56, %66 : vector<16x256xf32>
    %c1_42 = arith.constant 1 : index
    %c0_43 = arith.constant 0 : index
    %c0_44 = arith.constant 0 : index
    %68 = vector.load %arg5[%c1_42, %c0_43, %c0_44] : memref<3x1x256xf32, #tpu.memory_space<vmem>>, vector<1x1x256xf32>
    %69 = vector.shape_cast %68 : vector<1x1x256xf32> to vector<1x256xf32>
    %70 = vector.broadcast %69 : vector<1x256xf32> to vector<16x256xf32>
    %71 = arith.mulf %67, %70 : vector<16x256xf32>
    %c1_45 = arith.constant 1 : index
    %c0_46 = arith.constant 0 : index
    %c0_47 = arith.constant 0 : index
    %72 = vector.load %arg6[%c1_45, %c0_46, %c0_47] : memref<3x1x256xf32, #tpu.memory_space<vmem>>, vector<1x1x256xf32>
    %73 = vector.shape_cast %72 : vector<1x1x256xf32> to vector<1x256xf32>
    %74 = vector.broadcast %73 : vector<1x256xf32> to vector<16x256xf32>
    %75 = arith.addf %71, %74 : vector<16x256xf32>
    %cst_48 = arith.constant 0.000000e+00 : f32
    %76 = vector.broadcast %cst_48 : f32 to vector<16x256xf32>
    %77 = arith.maximumf %75, %76 : vector<16x256xf32>
    %c1_i32_49 = arith.constant 1 : i32
    %78 = tpu.dynamic_rotate %77 by %c1_i32_49 dim 0 : vector<16x256xf32>, i32 -> vector<16x256xf32>
    %c1_i32_50 = arith.constant 1 : i32
    %79 = vector.broadcast %c1_i32_50 : i32 to vector<16x1xi32>
    %80 = arith.cmpi slt, %7, %79 : vector<16x1xi32>
    %cst_51 = arith.constant 0.000000e+00 : f32
    %81 = vector.shape_cast %80 : vector<16x1xi1> to vector<16x1xi1>
    %82 = vector.broadcast %81 : vector<16x1xi1> to vector<16x256xi1>
    %83 = vector.broadcast %cst_51 : f32 to vector<16x256xf32>
    %84 = arith.select %82, %83, %78 : vector<16x256xi1>, vector<16x256xf32>
    %c6 = arith.constant 6 : index
    %c0_52 = arith.constant 0 : index
    %c0_53 = arith.constant 0 : index
    %85 = vector.load %arg4[%c6, %c0_52, %c0_53] : memref<9x256x256xf32, #tpu.memory_space<vmem>>, vector<1x256x256xf32>
    %86 = vector.shape_cast %85 : vector<1x256x256xf32> to vector<256x256xf32>
    %cst_54 = arith.constant dense<0.000000e+00> : vector<16x256xf32>
    %87 = tpu.matmul %84, %86, %cst_54 {dimension_numbers = #tpu.dot_dimension_numbers<[1], [0], [0], [1], [0, 0, 1, 1], [], []>} : vector<16x256xf32>, vector<256x256xf32>, vector<16x256xf32> -> vector<16x256xf32>
    %c7 = arith.constant 7 : index
    %c0_55 = arith.constant 0 : index
    %c0_56 = arith.constant 0 : index
    %88 = vector.load %arg4[%c7, %c0_55, %c0_56] : memref<9x256x256xf32, #tpu.memory_space<vmem>>, vector<1x256x256xf32>
    %89 = vector.shape_cast %88 : vector<1x256x256xf32> to vector<256x256xf32>
    %cst_57 = arith.constant dense<0.000000e+00> : vector<16x256xf32>
    %90 = tpu.matmul %77, %89, %cst_57 {dimension_numbers = #tpu.dot_dimension_numbers<[1], [0], [0], [1], [0, 0, 1, 1], [], []>} : vector<16x256xf32>, vector<256x256xf32>, vector<16x256xf32> -> vector<16x256xf32>
    %91 = arith.addf %87, %90 : vector<16x256xf32>
    %c15_i32_58 = arith.constant 15 : i32
    %92 = tpu.dynamic_rotate %77 by %c15_i32_58 dim 0 : vector<16x256xf32>, i32 -> vector<16x256xf32>
    %c15_i32_59 = arith.constant 15 : i32
    %93 = vector.broadcast %c15_i32_59 : i32 to vector<16x1xi32>
    %94 = arith.cmpi sge, %7, %93 : vector<16x1xi32>
    %cst_60 = arith.constant 0.000000e+00 : f32
    %95 = vector.shape_cast %94 : vector<16x1xi1> to vector<16x1xi1>
    %96 = vector.broadcast %95 : vector<16x1xi1> to vector<16x256xi1>
    %97 = vector.broadcast %cst_60 : f32 to vector<16x256xf32>
    %98 = arith.select %96, %97, %92 : vector<16x256xi1>, vector<16x256xf32>
    %c8 = arith.constant 8 : index
    %c0_61 = arith.constant 0 : index
    %c0_62 = arith.constant 0 : index
    %99 = vector.load %arg4[%c8, %c0_61, %c0_62] : memref<9x256x256xf32, #tpu.memory_space<vmem>>, vector<1x256x256xf32>
    %100 = vector.shape_cast %99 : vector<1x256x256xf32> to vector<256x256xf32>
    %cst_63 = arith.constant dense<0.000000e+00> : vector<16x256xf32>
    %101 = tpu.matmul %98, %100, %cst_63 {dimension_numbers = #tpu.dot_dimension_numbers<[1], [0], [0], [1], [0, 0, 1, 1], [], []>} : vector<16x256xf32>, vector<256x256xf32>, vector<16x256xf32> -> vector<16x256xf32>
    %102 = arith.addf %91, %101 : vector<16x256xf32>
    %c2_64 = arith.constant 2 : index
    %c0_65 = arith.constant 0 : index
    %c0_66 = arith.constant 0 : index
    %103 = vector.load %arg5[%c2_64, %c0_65, %c0_66] : memref<3x1x256xf32, #tpu.memory_space<vmem>>, vector<1x1x256xf32>
    %104 = vector.shape_cast %103 : vector<1x1x256xf32> to vector<1x256xf32>
    %105 = vector.broadcast %104 : vector<1x256xf32> to vector<16x256xf32>
    %106 = arith.mulf %102, %105 : vector<16x256xf32>
    %c2_67 = arith.constant 2 : index
    %c0_68 = arith.constant 0 : index
    %c0_69 = arith.constant 0 : index
    %107 = vector.load %arg6[%c2_67, %c0_68, %c0_69] : memref<3x1x256xf32, #tpu.memory_space<vmem>>, vector<1x1x256xf32>
    %108 = vector.shape_cast %107 : vector<1x1x256xf32> to vector<1x256xf32>
    %109 = vector.broadcast %108 : vector<1x256xf32> to vector<16x256xf32>
    %110 = arith.addf %106, %109 : vector<16x256xf32>
    %cst_70 = arith.constant 0.000000e+00 : f32
    %111 = vector.broadcast %cst_70 : f32 to vector<16x256xf32>
    %112 = arith.maximumf %110, %111 : vector<16x256xf32>
    %c0_71 = arith.constant 0 : index
    %c0_72 = arith.constant 0 : index
    %113 = vector.load %arg7[%c0_71, %c0_72] : memref<256x128xf32, #tpu.memory_space<vmem>>, vector<256x128xf32>
    %cst_73 = arith.constant dense<0.000000e+00> : vector<16x128xf32>
    %114 = tpu.matmul %112, %113, %cst_73 {dimension_numbers = #tpu.dot_dimension_numbers<[1], [0], [0], [1], [0, 0, 1, 1], [], []>} : vector<16x256xf32>, vector<256x128xf32>, vector<16x128xf32> -> vector<16x128xf32>
    %c0_74 = arith.constant 0 : index
    %c0_75 = arith.constant 0 : index
    %115 = vector.load %arg8[%c0_74, %c0_75] : memref<1x128xf32, #tpu.memory_space<vmem>>, vector<1x128xf32>
    %116 = vector.broadcast %115 : vector<1x128xf32> to vector<16x128xf32>
    %117 = arith.addf %114, %116 : vector<16x128xf32>
    %c0_76 = arith.constant 0 : index
    %c0_77 = arith.constant 0 : index
    %c0_78 = arith.constant 0 : index
    %118 = vector.load %arg9[%c0_76, %c0_77, %c0_78] : memref<1x16x128xf32, #tpu.memory_space<vmem>>, vector<1x16x128xf32>
    %119 = vector.shape_cast %118 : vector<1x16x128xf32> to vector<16x128xf32>
    %120 = vector.shape_cast %117 : vector<16x128xf32> to vector<1x16x128xf32>
    tpu.vector_store %arg9[%c0_76, %c0_77, %c0_78], %120 {strides = array<i32>} : memref<1x16x128xf32, #tpu.memory_space<vmem>>, vector<1x16x128xf32>,
    return
  }
  func.func @transform_0(%arg0: i32) -> (i32, i32, i32) {
    %c0_i32 = arith.constant 0 : i32
    %c0_i32_0 = arith.constant 0 : i32
    %c0_i32_1 = arith.constant 0 : i32
    return %arg0, %c0_i32, %c0_i32_0 : i32, i32, i32
  }
  func.func @transform_1(%arg0: i32) -> (i32, i32) {
    %c0_i32 = arith.constant 0 : i32
    %c0_i32_0 = arith.constant 0 : i32
    %c0_i32_1 = arith.constant 0 : i32
    return %c0_i32, %c0_i32_0 : i32, i32
  }
  func.func @transform_2(%arg0: i32) -> (i32, i32) {
    %c0_i32 = arith.constant 0 : i32
    %c0_i32_0 = arith.constant 0 : i32
    %c0_i32_1 = arith.constant 0 : i32
    return %c0_i32, %c0_i32_0 : i32, i32
  }
  func.func @transform_3(%arg0: i32) -> (i32, i32, i32) {
    %c0_i32 = arith.constant 0 : i32
    %c0_i32_0 = arith.constant 0 : i32
    %c0_i32_1 = arith.constant 0 : i32
    %c0_i32_2 = arith.constant 0 : i32
    return %c0_i32, %c0_i32_0, %c0_i32_1 : i32, i32, i32
  }
  func.func @transform_4(%arg0: i32) -> (i32, i32, i32) {
    %c0_i32 = arith.constant 0 : i32
    %c0_i32_0 = arith.constant 0 : i32
    %c0_i32_1 = arith.constant 0 : i32
    %c0_i32_2 = arith.constant 0 : i32
    return %c0_i32, %c0_i32_0, %c0_i32_1 : i32, i32, i32
  }
  func.func @transform_5(%arg0: i32) -> (i32, i32, i32) {
    %c0_i32 = arith.constant 0 : i32
    %c0_i32_0 = arith.constant 0 : i32
    %c0_i32_1 = arith.constant 0 : i32
    %c0_i32_2 = arith.constant 0 : i32
    return %c0_i32, %c0_i32_0, %c0_i32_1 : i32, i32, i32
  }
  func.func @transform_6(%arg0: i32) -> (i32, i32) {
    %c0_i32 = arith.constant 0 : i32
    %c0_i32_0 = arith.constant 0 : i32
    %c0_i32_1 = arith.constant 0 : i32
    return %c0_i32, %c0_i32_0 : i32, i32
  }
  func.func @transform_7(%arg0: i32) -> (i32, i32) {
    %c0_i32 = arith.constant 0 : i32
    %c0_i32_0 = arith.constant 0 : i32
    %c0_i32_1 = arith.constant 0 : i32
    return %c0_i32, %c0_i32_0 : i32, i32
  }
  func.func @transform_8(%arg0: i32) -> (i32, i32, i32) {
    %c0_i32 = arith.constant 0 : i32
    %c0_i32_0 = arith.constant 0 : i32
    %c0_i32_1 = arith.constant 0 : i32
    return %arg0, %c0_i32, %c0_i32_0 : i32, i32, i32
  }
}

</mosaic_0001>

<llo_original>
// kernel: tpu_custom_call.1
$region0: #{tpu_custom_call.1}
  #allocation0 [shape = 'u32[]', space=smem, size = 0x4, offset = 0x4, fixed_abs, tag = 'smem constant byte address 0x4 - core index']
  #allocation1 [shape = 'u32[144,128]{1,0:T(1,128)}', space=vmem, size = 0x12000, scoped, tag = 'internal scratch']
  %s0 = inlined_call_operand.hbm [shape: f32[2,16,256], index: 0, kind: input, shape index: {}]
  %s1 = inlined_call_operand.hbm [shape: f32[256,256], index: 1, kind: input, shape index: {}]
  %s2 = inlined_call_operand.hbm [shape: f32[1,256], index: 2, kind: input, shape index: {}]
  %s3 = inlined_call_operand.hbm [shape: f32[9,256,256], index: 3, kind: input, shape index: {}]
  %s4 = inlined_call_operand.hbm [shape: f32[3,1,256], index: 4, kind: input, shape index: {}]
  %s5 = inlined_call_operand.hbm [shape: f32[3,1,256], index: 5, kind: input, shape index: {}]
  %s6 = inlined_call_operand.hbm [shape: f32[256,128], index: 6, kind: input, shape index: {}]
  %s7 = inlined_call_operand.hbm [shape: f32[1,128], index: 7, kind: input, shape index: {}]
  %s8 = inlined_call_operand.hbm [shape: f32[2,16,128], index: 8, kind: output, shape index: {}]
  %s9 = sld [smem:[#allocation0]]
  $region97: #{tpu_custom_call.1} parent=0
    _
  %s11 = ssub.s32 1, %s9
  %s12 = scalar_select 0, %s11, %s9
  $region1: #{tpu_custom_call.1} parent=0
    #allocation2 [shape = 'u8[32768]{0}', space=vmem, size = 0x8000, scoped, tag = 'input window, operand 0']
    #allocation3 [shape = 's32[2]{0}', space=sflag, size = 0x8, scoped, tag = 'scoped memory for tpu_custom_call.1']
    #allocation4 [shape = 's32[2]{0}', space=sflag, size = 0x8, scoped, tag = 'scoped memory for tpu_custom_call.1']
    #allocation5 [shape = 'u8[262144]{0}', space=vmem, size = 0x40000, scoped, tag = 'input window, operand 1, single buffered']
    #allocation6 [shape = 's32[1]{0}', space=sflag, size = 0x4, scoped, tag = 'scoped memory for tpu_custom_call.1']
    #allocation7 [shape = 'u8[1024]{0}', space=vmem, size = 0x400, scoped, tag = 'input window, operand 2, single buffered']
    #allocation8 [shape = 'u8[2359296]{0}', space=vmem, size = 0x240000, scoped, tag = 'input window, operand 3, single buffered']
    #allocation9 [shape = 's32[1]{0}', space=sflag, size = 0x4, scoped, tag = 'scoped memory for tpu_custom_call.1']
    #allocation10 [shape = 'u8[3072]{0}', space=vmem, size = 0xc00, scoped, tag = 'input window, operand 4, single buffered']
    #allocation11 [shape = 'u8[3072]{0}', space=vmem, size = 0xc00, scoped, tag = 'input window, operand 5, single buffered']
    #allocation12 [shape = 's32[1]{0}', space=sflag, size = 0x4, scoped, tag = 'scoped memory for tpu_custom_call.1']
    #allocation13 [shape = 'u8[131072]{0}', space=vmem, size = 0x20000, scoped, tag = 'input window, operand 6, single buffered']
    #allocation14 [shape = 'u8[512]{0}', space=vmem, size = 0x400, scoped, tag = 'input window, operand 7, single buffered']
    #allocation15 [shape = 's32[1]{0}', space=sflag, size = 0x4, scoped, tag = 'scoped memory for tpu_custom_call.1']
    #allocation16 [shape = 'u8[16384]{0}', space=vmem, size = 0x4000, scoped, tag = 'output window, operand 0']
    %13 = vsyncpa [#allocation3], 0
    %s14 = scalar_lea.sflag [#allocation3], 1
    %15 = vsyncpa %s14, 0
    %16 = vsyncpa [#allocation6], 0
    %17 = vsyncpa [#allocation9], 0
    %18 = vsyncpa [#allocation12], 0
    %19 = vsyncpa [#allocation15], 0
    %20 = vsyncpa [#allocation4], 0
    %s21 = scalar_lea.sflag [#allocation4], 1
    %22 = vsyncpa %s21, 0
    loop: start=0, step=1, limit=4
    $region2: #{tpu_custom_call.1} parent=1 // loop_pre_header
      _
    $region3: #{tpu_custom_call.1} parent=1 // loop_header
      %s24 = sphi 0, %s28
      %p25 = scmp.ge.s32.totalorder %s24, 4
      %s34 = sphi 0, %s36
      %s37 = sphi 0, %s34
      %s38 = sphi 0, %s37
      %s54 = sphi 0, %s38
      %s58 = sphi 0, %s58
      %s60 = sphi 0, %s58
      %s61 = sphi 0, %s60
      %s75 = sphi 0, %s61
      %s79 = sphi 0, %s79
      %s81 = sphi 0, %s79
      %s82 = sphi 0, %s81
      %s96 = sphi 0, %s82
      %s100 = sphi 0, %s100
      %s102 = sphi 0, %s100
      %s103 = sphi 0, %s102
      %s117 = sphi 0, %s103
      %s121 = sphi 0, %s121
      %s123 = sphi 0, %s121
      %s124 = sphi 0, %s123
      %s138 = sphi 0, %s124
      %s142 = sphi 0, %s142
      %s144 = sphi 0, %s142
      %s145 = sphi 0, %s144
      %s159 = sphi 0, %s145
      %s163 = sphi 0, %s163
      %s165 = sphi 0, %s163
      %s166 = sphi 0, %s165
      %s180 = sphi 0, %s166
      %s184 = sphi 0, %s184
      %s186 = sphi 0, %s184
      %s187 = sphi 0, %s186
      %s201 = sphi 0, %s187
      %s207 = sphi 0, %s209
      %s210 = sphi 0, %s207
      %s211 = sphi 0, %s210
      %s227 = sphi 0, %s211
    $region4: #{tpu_custom_call.1} parent=1 // loop_header_branch
      %27 = sbr.rel (%p25) target = $region8
    $region5: #{tpu_custom_call.1} parent=1 // loop_body
      %s29 = ssub.s32 %s24, 1
      %s30 = ssub.s32 %s24, 2
      %s31 = sadd.s32 %s24, 1
      %s32 = ssub.s32 %s24, %s31
      %p33 = scmp.eq.s32.totalorder %s32, 0
      %s35 = sadd.s32 %s34, 1
      %s36 = scalar_select %p33, %s34, %s35
      %p39 = pneg %p33
      %p40 = scmp.eq.s32.totalorder %s24, 1
      %p41 = por %p39, %p40
      %p42 = scmp.ne.s32.totalorder %s34, %s37
      %p43 = scmp.eq.s32.totalorder %s24, 0
      %p44 = por %p42, %p43
      %p45 = scmp.ne.s32.totalorder %s34, %s37
      %p46 = scmp.eq.s32.totalorder %s29, 1
      %p47 = por %p45, %p46
      %p48 = scmp.ne.s32.totalorder %s37, %s38
      %p49 = scmp.eq.s32.totalorder %s29, 0
      %p50 = por %p48, %p49
      %p51 = scmp.ne.s32.totalorder %s37, %s38
      %p52 = scmp.eq.s32.totalorder %s30, 1
      %p53 = por %p51, %p52
      %p55 = scmp.ne.s32.totalorder %s38, %s54
      %p56 = scmp.eq.s32.totalorder %s30, 0
      %p57 = por %p55, %p56
      %s59 = sadd.s32 %s58, 1
      %p62 = scmp.eq.s32.totalorder %s24, 1
      %p63 = scmp.ne.s32.totalorder %s58, %s60
      %p64 = scmp.eq.s32.totalorder %s24, 0
      %p65 = por %p63, %p64
      %p66 = scmp.ne.s32.totalorder %s58, %s60
      %p67 = scmp.eq.s32.totalorder %s29, 1
      %p68 = por %p66, %p67
      %p69 = scmp.ne.s32.totalorder %s60, %s61
      %p70 = scmp.eq.s32.totalorder %s29, 0
      %p71 = por %p69, %p70
      %p72 = scmp.ne.s32.totalorder %s60, %s61
      %p73 = scmp.eq.s32.totalorder %s30, 1
      %p74 = por %p72, %p73
      %p76 = scmp.ne.s32.totalorder %s61, %s75
      %p77 = scmp.eq.s32.totalorder %s30, 0
      %p78 = por %p76, %p77
      %s80 = sadd.s32 %s79, 1
      %p83 = scmp.eq.s32.totalorder %s24, 1
      %p84 = scmp.ne.s32.totalorder %s79, %s81
      %p85 = scmp.eq.s32.totalorder %s24, 0
      %p86 = por %p84, %p85
      %p87 = scmp.ne.s32.totalorder %s79, %s81
      %p88 = scmp.eq.s32.totalorder %s29, 1
      %p89 = por %p87, %p88
      %p90 = scmp.ne.s32.totalorder %s81, %s82
      %p91 = scmp.eq.s32.totalorder %s29, 0
      %p92 = por %p90, %p91
      %p93 = scmp.ne.s32.totalorder %s81, %s82
      %p94 = scmp.eq.s32.totalorder %s30, 1
      %p95 = por %p93, %p94
      %p97 = scmp.ne.s32.totalorder %s82, %s96
      %p98 = scmp.eq.s32.totalorder %s30, 0
      %p99 = por %p97, %p98
      %s101 = sadd.s32 %s100, 1
      %p104 = scmp.eq.s32.totalorder %s24, 1
      %p105 = scmp.ne.s32.totalorder %s100, %s102
      %p106 = scmp.eq.s32.totalorder %s24, 0
      %p107 = por %p105, %p106
      %p108 = scmp.ne.s32.totalorder %s100, %s102
      %p109 = scmp.eq.s32.totalorder %s29, 1
      %p110 = por %p108, %p109
      %p111 = scmp.ne.s32.totalorder %s102, %s103
      %p112 = scmp.eq.s32.totalorder %s29, 0
      %p113 = por %p111, %p112
      %p114 = scmp.ne.s32.totalorder %s102, %s103
      %p115 = scmp.eq.s32.totalorder %s30, 1
      %p116 = por %p114, %p115
      %p118 = scmp.ne.s32.totalorder %s103, %s117
      %p119 = scmp.eq.s32.totalorder %s30, 0
      %p120 = por %p118, %p119
      %s122 = sadd.s32 %s121, 1
      %p125 = scmp.eq.s32.totalorder %s24, 1
      %p126 = scmp.ne.s32.totalorder %s121, %s123
      %p127 = scmp.eq.s32.totalorder %s24, 0
      %p128 = por %p126, %p127
      %p129 = scmp.ne.s32.totalorder %s121, %s123
      %p130 = scmp.eq.s32.totalorder %s29, 1
      %p131 = por %p129, %p130
      %p132 = scmp.ne.s32.totalorder %s123, %s124
      %p133 = scmp.eq.s32.totalorder %s29, 0
      %p134 = por %p132, %p133
      %p135 = scmp.ne.s32.totalorder %s123, %s124
      %p136 = scmp.eq.s32.totalorder %s30, 1
      %p137 = por %p135, %p136
      %p139 = scmp.ne.s32.totalorder %s124, %s138
      %p140 = scmp.eq.s32.totalorder %s30, 0
      %p141 = por %p139, %p140
      %s143 = sadd.s32 %s142, 1
      %p146 = scmp.eq.s32.totalorder %s24, 1
      %p147 = scmp.ne.s32.totalorder %s142, %s144
      %p148 = scmp.eq.s32.totalorder %s24, 0
      %p149 = por %p147, %p148
      %p150 = scmp.ne.s32.totalorder %s142, %s144
      %p151 = scmp.eq.s32.totalorder %s29, 1
      %p152 = por %p150, %p151
      %p153 = scmp.ne.s32.totalorder %s144, %s145
      %p154 = scmp.eq.s32.totalorder %s29, 0
      %p155 = por %p153, %p154
      %p156 = scmp.ne.s32.totalorder %s144, %s145
      %p157 = scmp.eq.s32.totalorder %s30, 1
      %p158 = por %p156, %p157
      %p160 = scmp.ne.s32.totalorder %s145, %s159
      %p161 = scmp.eq.s32.totalorder %s30, 0
      %p162 = por %p160, %p161
      %s164 = sadd.s32 %s163, 1
      %p167 = scmp.eq.s32.totalorder %s24, 1
      %p168 = scmp.ne.s32.totalorder %s163, %s165
      %p169 = scmp.eq.s32.totalorder %s24, 0
      %p170 = por %p168, %p169
      %p171 = scmp.ne.s32.totalorder %s163, %s165
      %p172 = scmp.eq.s32.totalorder %s29, 1
      %p173 = por %p171, %p172
      %p174 = scmp.ne.s32.totalorder %s165, %s166
      %p175 = scmp.eq.s32.totalorder %s29, 0
      %p176 = por %p174, %p175
      %p177 = scmp.ne.s32.totalorder %s165, %s166
      %p178 = scmp.eq.s32.totalorder %s30, 1
      %p179 = por %p177, %p178
      %p181 = scmp.ne.s32.totalorder %s166, %s180
      %p182 = scmp.eq.s32.totalorder %s30, 0
      %p183 = por %p181, %p182
      %s185 = sadd.s32 %s184, 1
      %p188 = scmp.eq.s32.totalorder %s24, 1
      %p189 = scmp.ne.s32.totalorder %s184, %s186
      %p190 = scmp.eq.s32.totalorder %s24, 0
      %p191 = por %p189, %p190
      %p192 = scmp.ne.s32.totalorder %s184, %s186
      %p193 = scmp.eq.s32.totalorder %s29, 1
      %p194 = por %p192, %p193
      %p195 = scmp.ne.s32.totalorder %s186, %s187
      %p196 = scmp.eq.s32.totalorder %s29, 0
      %p197 = por %p195, %p196
      %p198 = scmp.ne.s32.totalorder %s186, %s187
      %p199 = scmp.eq.s32.totalorder %s30, 1
      %p200 = por %p198, %p199
      %p202 = scmp.ne.s32.totalorder %s187, %s201
      %p203 = scmp.eq.s32.totalorder %s30, 0
      %p204 = por %p202, %p203
      %s205 = ssub.s32 %s24, %s31
      %p206 = scmp.eq.s32.totalorder %s205, 0
      %s208 = sadd.s32 %s207, 1
      %s209 = scalar_select %p206, %s207, %s208
      %p212 = pneg %p206
      %p213 = scmp.eq.s32.totalorder %s24, 1
      %p214 = por %p212, %p213
      %p215 = scmp.ne.s32.totalorder %s207, %s210
      %p216 = scmp.eq.s32.totalorder %s24, 0
      %p217 = por %p215, %p216
      %p218 = scmp.ne.s32.totalorder %s207, %s210
      %p219 = scmp.eq.s32.totalorder %s29, 1
      %p220 = por %p218, %p219
      %p221 = scmp.ne.s32.totalorder %s210, %s211
      %p222 = scmp.eq.s32.totalorder %s29, 0
      %p223 = por %p221, %p222
      %p224 = scmp.ne.s32.totalorder %s210, %s211
      %p225 = scmp.eq.s32.totalorder %s30, 1
      %p226 = por %p224, %p225
      %p228 = scmp.ne.s32.totalorder %s211, %s227
      %p229 = scmp.eq.s32.totalorder %s30, 0
      %p230 = por %p228, %p229
      %p231 = scmp.le.s32.totalorder 1, %s24
      %p232 = scmp.lt.s32.totalorder %s24, 3
      %p233 = pnand %p231, %p232
      %p234 = pneg %p233
      // Predicated region
      $region9: #{tpu_custom_call.1} parent=5 // pred_check
        _
      $region10: #{tpu_custom_call.1} parent=5 // pred_check_branch
        %236 = sbr.rel (%p233) target = $region12
      $region11: #{tpu_custom_call.1} parent=5 // pred_region
        %s237 = ssub.s32 %s24, 1
        // Predicated region
        $region13: #{tpu_custom_call.1} parent=11 // pred_check
          %p238 = pneg %p71
        $region14: #{tpu_custom_call.1} parent=11 // pred_check_branch
          %240 = sbr.rel (%p238) target = $region16
        $region15: #{tpu_custom_call.1} parent=11 // pred_region
          %s242 = ssub.s32 8192, 8192
          %243 = vsyncadd [#allocation6], %s242
          %s244 = sshll.u32 [#allocation5], 4
          %s245 = int_to_ptr.vmem [resolvable:$true] %s244
          %250 = dma.hbm_to_vmem [thread:$0]  %s1, 8192, %s245, [#allocation6], 256, 256, 16
        $region16: #{tpu_custom_call.1} parent=11 // pred_fallthru
          _
        // Predicated region
        $region17: #{tpu_custom_call.1} parent=11 // pred_check
          %p251 = pneg %p92
        $region18: #{tpu_custom_call.1} parent=11 // pred_check_branch
          %253 = sbr.rel (%p251) target = $region20
        $region19: #{tpu_custom_call.1} parent=11 // pred_region
          %s255 = ssub.s32 32, 32
          %256 = vsyncadd [#allocation6], %s255
          %s258 = sshll.u32 [#allocation7], 4
          %s259 = int_to_ptr.vmem [resolvable:$true] %s258
          %261 = dma.hbm_to_vmem [thread:$0]  %s2, 32, %s259, [#allocation6]
        $region20: #{tpu_custom_call.1} parent=11 // pred_fallthru
          _
        // Predicated region
        $region21: #{tpu_custom_call.1} parent=11 // pred_check
          %p262 = pneg %p113
        $region22: #{tpu_custom_call.1} parent=11 // pred_check_branch
          %264 = sbr.rel (%p262) target = $region24
        $region23: #{tpu_custom_call.1} parent=11 // pred_region
          %s266 = ssub.s32 73728, 73728
          %267 = vsyncadd [#allocation9], %s266
          %s268 = sshll.u32 [#allocation8], 4
          %s269 = int_to_ptr.vmem [resolvable:$true] %s268
          %274 = dma.hbm_to_vmem [thread:$0]  %s3, 73728, %s269, [#allocation9], 256, 256, 16
        $region24: #{tpu_custom_call.1} parent=11 // pred_fallthru
          _
        // Predicated region
        $region25: #{tpu_custom_call.1} parent=11 // pred_check
          %p275 = pneg %p134
        $region26: #{tpu_custom_call.1} parent=11 // pred_check_branch
          %277 = sbr.rel (%p275) target = $region28
        $region27: #{tpu_custom_call.1} parent=11 // pred_region
          %s279 = ssub.s32 96, 96
          %280 = vsyncadd [#allocation9], %s279
          %s281 = sshll.u32 [#allocation10], 4
          %s282 = int_to_ptr.vmem [resolvable:$true] %s281
          %287 = dma.hbm_to_vmem [thread:$0]  %s4, 96, %s282, [#allocation9], 32, 32, 2
        $region28: #{tpu_custom_call.1} parent=11 // pred_fallthru
          _
        // Predicated region
        $region29: #{tpu_custom_call.1} parent=11 // pred_check
          %p288 = pneg %p155
        $region30: #{tpu_custom_call.1} parent=11 // pred_check_branch
          %290 = sbr.rel (%p288) target = $region32
        $region31: #{tpu_custom_call.1} parent=11 // pred_region
          %s292 = ssub.s32 96, 96
          %293 = vsyncadd [#allocation12], %s292
          %s294 = sshll.u32 [#allocation11], 4
          %s295 = int_to_ptr.vmem [resolvable:$true] %s294
          %300 = dma.hbm_to_vmem [thread:$0]  %s5, 96, %s295, [#allocation12], 32, 32, 2
        $region32: #{tpu_custom_call.1} parent=11 // pred_fallthru
          _
        // Predicated region
        $region33: #{tpu_custom_call.1} parent=11 // pred_check
          %p301 = pneg %p176
        $region34: #{tpu_custom_call.1} parent=11 // pred_check_branch
          %303 = sbr.rel (%p301) target = $region36
        $region35: #{tpu_custom_call.1} parent=11 // pred_region
          %s305 = ssub.s32 4096, 4096
          %306 = vsyncadd [#allocation12], %s305
          %s307 = sshll.u32 [#allocation13], 4
          %s308 = int_to_ptr.vmem [resolvable:$true] %s307
          %313 = dma.hbm_to_vmem [thread:$0]  %s6, 4096, %s308, [#allocation12], 128, 128, 8
        $region36: #{tpu_custom_call.1} parent=11 // pred_fallthru
          _
        // Predicated region
        $region37: #{tpu_custom_call.1} parent=11 // pred_check
          %p314 = pneg %p197
        $region38: #{tpu_custom_call.1} parent=11 // pred_check_branch
          %316 = sbr.rel (%p314) target = $region40
        $region39: #{tpu_custom_call.1} parent=11 // pred_region
          %s318 = ssub.s32 16, 16
          %319 = vsyncadd [#allocation15], %s318
          %s321 = sshll.u32 [#allocation14], 4
          %s322 = int_to_ptr.vmem [resolvable:$true] %s321
          %324 = dma.hbm_to_vmem [thread:$0]  %s7, 16, %s322, [#allocation15]
        $region40: #{tpu_custom_call.1} parent=11 // pred_fallthru
          _
      $region12: #{tpu_custom_call.1} parent=5 // pred_fallthru
        _
      %p325 = scmp.lt.s32.totalorder %s24, 2
      // Predicated region
      $region41: #{tpu_custom_call.1} parent=5 // pred_check
        %p326 = pneg %p325
      $region42: #{tpu_custom_call.1} parent=5 // pred_check_branch
        %328 = sbr.rel (%p326) target = $region44
      $region43: #{tpu_custom_call.1} parent=5 // pred_region
        // Predicated region
        $region45: #{tpu_custom_call.1} parent=43 // pred_check
          %p329 = pneg %p44
        $region46: #{tpu_custom_call.1} parent=43 // pred_check_branch
          %331 = sbr.rel (%p329) target = $region48
        $region47: #{tpu_custom_call.1} parent=43 // pred_region
          %s332 = sand.u32 %s34, 1
          %s333 = scalar_lea.sflag [#allocation3], %s332
          %s334 = sand.u32 %s34, 1
          %s335 = smul.addr %s334, 32
          %s336 = scalar_lea.vmem [#allocation2], %s335
          %s338 = ssub.s32 512, 512
          %339 = vsyncadd %s333, %s338
          %s340 = smul.addr %s24, 4
          %s341 = smul.addr %s340, 128
          %s342 = scalar_lea.hbm %s0, %s341
          %s343 = sshll.u32 %s336, 4
          %s344 = int_to_ptr.vmem [resolvable:$true] %s343
          %349 = dma.hbm_to_vmem [thread:$0]  %s342, 512, %s344, %s333, 256, 256, 16
        $region48: #{tpu_custom_call.1} parent=43 // pred_fallthru
          _
      $region44: #{tpu_custom_call.1} parent=5 // pred_fallthru
        _
      %p350 = scmp.le.s32.totalorder 1, %s24
      %p351 = scmp.lt.s32.totalorder %s24, 3
      %p352 = pnand %p350, %p351
      %p353 = pneg %p352
      // Predicated region
      $region49: #{tpu_custom_call.1} parent=5 // pred_check
        _
      $region50: #{tpu_custom_call.1} parent=5 // pred_check_branch
        %355 = sbr.rel (%p352) target = $region52
      $region51: #{tpu_custom_call.1} parent=5 // pred_region
        %s356 = ssub.s32 %s24, 1
        %s357 = sand.u32 %s37, 1
        %s358 = scalar_lea.sflag [#allocation3], %s357
        %s359 = sand.u32 %s37, 1
        %s360 = smul.addr %s359, 32
        %s361 = scalar_lea.vmem [#allocation2], %s360
        // Predicated region
        $region53: #{tpu_custom_call.1} parent=51 // pred_check
          %p362 = pneg %p50
        $region54: #{tpu_custom_call.1} parent=51 // pred_check_branch
          %364 = sbr.rel (%p362) target = $region56
        $region55: #{tpu_custom_call.1} parent=51 // pred_region
          %365 = dma.done %s358, 512
        $region56: #{tpu_custom_call.1} parent=51 // pred_fallthru
          _
        // Predicated region
        $region57: #{tpu_custom_call.1} parent=51 // pred_check
          %p366 = pneg %p71
        $region58: #{tpu_custom_call.1} parent=51 // pred_check_branch
          %368 = sbr.rel (%p366) target = $region60
        $region59: #{tpu_custom_call.1} parent=51 // pred_region
          %369 = dma.done [#allocation6], 8192
        $region60: #{tpu_custom_call.1} parent=51 // pred_fallthru
          _
        // Predicated region
        $region61: #{tpu_custom_call.1} parent=51 // pred_check
          %p370 = pneg %p92
        $region62: #{tpu_custom_call.1} parent=51 // pred_check_branch
          %372 = sbr.rel (%p370) target = $region64
        $region63: #{tpu_custom_call.1} parent=51 // pred_region
          %373 = dma.done [#allocation6], 32
        $region64: #{tpu_custom_call.1} parent=51 // pred_fallthru
          _
        // Predicated region
        $region65: #{tpu_custom_call.1} parent=51 // pred_check
          %p374 = pneg %p113
        $region66: #{tpu_custom_call.1} parent=51 // pred_check_branch
          %376 = sbr.rel (%p374) target = $region68
        $region67: #{tpu_custom_call.1} parent=51 // pred_region
          %377 = dma.done [#allocation9], 73728
        $region68: #{tpu_custom_call.1} parent=51 // pred_fallthru
          _
        // Predicated region
        $region69: #{tpu_custom_call.1} parent=51 // pred_check
          %p378 = pneg %p134
        $region70: #{tpu_custom_call.1} parent=51 // pred_check_branch
          %380 = sbr.rel (%p378) target = $region72
        $region71: #{tpu_custom_call.1} parent=51 // pred_region
          %381 = dma.done [#allocation9], 96
        $region72: #{tpu_custom_call.1} parent=51 // pred_fallthru
          _
        // Predicated region
        $region73: #{tpu_custom_call.1} parent=51 // pred_check
          %p382 = pneg %p155
        $region74: #{tpu_custom_call.1} parent=51 // pred_check_branch
          %384 = sbr.rel (%p382) target = $region76
        $region75: #{tpu_custom_call.1} parent=51 // pred_region
          %385 = dma.done [#allocation12], 96
        $region76: #{tpu_custom_call.1} parent=51 // pred_fallthru
          _
        // Predicated region
        $region77: #{tpu_custom_call.1} parent=51 // pred_check
          %p386 = pneg %p176
        $region78: #{tpu_custom_call.1} parent=51 // pred_check_branch
          %388 = sbr.rel (%p386) target = $region80
        $region79: #{tpu_custom_call.1} parent=51 // pred_region
          %389 = dma.done [#allocation12], 4096
        $region80: #{tpu_custom_call.1} parent=51 // pred_fallthru
          _
        // Predicated region
        $region81: #{tpu_custom_call.1} parent=51 // pred_check
          %p390 = pneg %p197
        $region82: #{tpu_custom_call.1} parent=51 // pred_check_branch
          %392 = sbr.rel (%p390) target = $region84
        $region83: #{tpu_custom_call.1} parent=51 // pred_region
          %393 = dma.done [#allocation15], 16
        $region84: #{tpu_custom_call.1} parent=51 // pred_fallthru
          _
        %s394 = sand.u32 %s37, 1
        %s395 = scalar_lea.sflag [#allocation3], %s394
        %s396 = sand.u32 %s37, 1
        %s397 = smul.addr %s396, 32
        %s398 = scalar_lea.vmem [#allocation2], %s397
        %p399 = pneg %p50
        %p400 = pneg %p47
        %p401 = pneg %p71
        %p402 = pneg %p68
        %p403 = pneg %p92
        %p404 = pneg %p89
        %p405 = pneg %p113
        %p406 = pneg %p110
        %p407 = pneg %p134
        %p408 = pneg %p131
        %p409 = pneg %p155
        %p410 = pneg %p152
        %p411 = pneg %p176
        %p412 = pneg %p173
        %p413 = pneg %p197
        %p414 = pneg %p194
        %p415 = pneg %p223
        %p416 = pneg %p220
        %s417 = sand.u32 %s210, 1
        %s418 = scalar_lea.sflag [#allocation4], %s417
        %s419 = sand.u32 %s210, 1
        %s420 = smul.addr %s419, 16
        %s421 = scalar_lea.vmem [#allocation16], %s420
        %v422 = vld [vmem:[%s361] sm:$0xff]
        %v423 = vld [vmem:[%s361 + $0x8] sm:$0xff]
        %v424 = vld [vmem:[%s361 + $0x10] sm:$0xff]
        %v425 = vld [vmem:[%s361 + $0x18] sm:$0xff]
        %v426 = vld [vmem:[#allocation5] sm:$0xff]
        %v427 = vld [vmem:[#allocation5 + $0x8] sm:$0xff]
        %v428 = vld [vmem:[#allocation5 + $0x10] sm:$0xff]
        %v429 = vld [vmem:[#allocation5 + $0x18] sm:$0xff]
        %v430 = vld [vmem:[#allocation5 + $0x20] sm:$0xff]
        %v431 = vld [vmem:[#allocation5 + $0x28] sm:$0xff]
        %v432 = vld [vmem:[#allocation5 + $0x30] sm:$0xff]
        %v433 = vld [vmem:[#allocation5 + $0x38] sm:$0xff]
        %v434 = vld [vmem:[#allocation5 + $0x40] sm:$0xff]
        %v435 = vld [vmem:[#allocation5 + $0x48] sm:$0xff]
        %v436 = vld [vmem:[#allocation5 + $0x50] sm:$0xff]
        %v437 = vld [vmem:[#allocation5 + $0x58] sm:$0xff]
        %v438 = vld [vmem:[#allocation5 + $0x60] sm:$0xff]
        %v439 = vld [vmem:[#allocation5 + $0x68] sm:$0xff]
        %v440 = vld [vmem:[#allocation5 + $0x70] sm:$0xff]
        %v441 = vld [vmem:[#allocation5 + $0x78] sm:$0xff]
        %v442 = vld [vmem:[#allocation5 + $0x80] sm:$0xff]
        %v443 = vld [vmem:[#allocation5 + $0x88] sm:$0xff]
        %v444 = vld [vmem:[#allocation5 + $0x90] sm:$0xff]
        %v445 = vld [vmem:[#allocation5 + $0x98] sm:$0xff]
        %v446 = vld [vmem:[#allocation5 + $0xa0] sm:$0xff]
        %v447 = vld [vmem:[#allocation5 + $0xa8] sm:$0xff]
        %v448 = vld [vmem:[#allocation5 + $0xb0] sm:$0xff]
        %v449 = vld [vmem:[#allocation5 + $0xb8] sm:$0xff]
        %v450 = vld [vmem:[#allocation5 + $0xc0] sm:$0xff]
        %v451 = vld [vmem:[#allocation5 + $0xc8] sm:$0xff]
        %v452 = vld [vmem:[#allocation5 + $0xd0] sm:$0xff]
        %v453 = vld [vmem:[#allocation5 + $0xd8] sm:$0xff]
        %v454 = vld [vmem:[#allocation5 + $0xe0] sm:$0xff]
        %v455 = vld [vmem:[#allocation5 + $0xe8] sm:$0xff]
        %v456 = vld [vmem:[#allocation5 + $0xf0] sm:$0xff]
        %v457 = vld [vmem:[#allocation5 + $0xf8] sm:$0xff]
        %v458 = vld [vmem:[#allocation5 + $0x100] sm:$0xff]
        %v459 = vld [vmem:[#allocation5 + $0x108] sm:$0xff]
        %v460 = vld [vmem:[#allocation5 + $0x110] sm:$0xff]
        %v461 = vld [vmem:[#allocation5 + $0x118] sm:$0xff]
        %v462 = vld [vmem:[#allocation5 + $0x120] sm:$0xff]
        %v463 = vld [vmem:[#allocation5 + $0x128] sm:$0xff]
        %v464 = vld [vmem:[#allocation5 + $0x130] sm:$0xff]
        %v465 = vld [vmem:[#allocation5 + $0x138] sm:$0xff]
        %v466 = vld [vmem:[#allocation5 + $0x140] sm:$0xff]
        %v467 = vld [vmem:[#allocation5 + $0x148] sm:$0xff]
        %v468 = vld [vmem:[#allocation5 + $0x150] sm:$0xff]
        %v469 = vld [vmem:[#allocation5 + $0x158] sm:$0xff]
        %v470 = vld [vmem:[#allocation5 + $0x160] sm:$0xff]
        %v471 = vld [vmem:[#allocation5 + $0x168] sm:$0xff]
        %v472 = vld [vmem:[#allocation5 + $0x170] sm:$0xff]
        %v473 = vld [vmem:[#allocation5 + $0x178] sm:$0xff]
        %v474 = vld [vmem:[#allocation5 + $0x180] sm:$0xff]
        %v475 = vld [vmem:[#allocation5 + $0x188] sm:$0xff]
        %v476 = vld [vmem:[#allocation5 + $0x190] sm:$0xff]
        %v477 = vld [vmem:[#allocation5 + $0x198] sm:$0xff]
        %v478 = vld [vmem:[#allocation5 + $0x1a0] sm:$0xff]
        %v479 = vld [vmem:[#allocation5 + $0x1a8] sm:$0xff]
        %v480 = vld [vmem:[#allocation5 + $0x1b0] sm:$0xff]
        %v481 = vld [vmem:[#allocation5 + $0x1b8] sm:$0xff]
        %v482 = vld [vmem:[#allocation5 + $0x1c0] sm:$0xff]
        %v483 = vld [vmem:[#allocation5 + $0x1c8] sm:$0xff]
        %v484 = vld [vmem:[#allocation5 + $0x1d0] sm:$0xff]
        %v485 = vld [vmem:[#allocation5 + $0x1d8] sm:$0xff]
        %v486 = vld [vmem:[#allocation5 + $0x1e0] sm:$0xff]
        %v487 = vld [vmem:[#allocation5 + $0x1e8] sm:$0xff]
        %v488 = vld [vmem:[#allocation5 + $0x1f0] sm:$0xff]
        %v489 = vld [vmem:[#allocation5 + $0x1f8] sm:$0xff]
        %v490 = vld [vmem:[#allocation7] sm:$0x3]
        %v492 = vlaneseq
        %v493 = vshrl.u32 %v492, 7
        %v494 = vsub.s32 0, %v493
        %v495 = vrot.slane %v490, %v494
        %v496 = vlaneseq
        %v497 = vshrl.u32 %v496, 7
        %v498 = vsub.s32 1, %v497
        %v499 = vrot.slane %v490, %v498
        %502 = vmatprep.subr.mxu0 %v427
        %503 = vmatpush1.msra.mxu0 %v426
        %504 = vmatprep.subr.mxu0 %v429
        %505 = vmatpush1.msra.mxu0 %v428
        %506 = vmatprep.subr.mxu0 %v431
        %507 = vmatpush1.msra.mxu0 %v430
        %508 = vmatprep.subr.mxu0 %v433
        %509 = vmatpush1.msra.mxu0 %v432
        %510 = vmatprep.subr.mxu0 %v435
        %511 = vmatpush1.msra.mxu0 %v434
        %512 = vmatprep.subr.mxu0 %v437
        %513 = vmatpush1.msra.mxu0 %v436
        %514 = vmatprep.subr.mxu0 %v439
        %515 = vmatpush1.msra.mxu0 %v438
        %516 = vmatprep.subr.mxu0 %v441
        %517 = vmatpush1.msra.mxu0 %v440
        %518 = vmatprep.subr.mxu0 %v443
        %519 = vmatpush1.msra.mxu0 %v442
        %520 = vmatprep.subr.mxu0 %v445
        %521 = vmatpush1.msra.mxu0 %v444
        %522 = vmatprep.subr.mxu0 %v447
        %523 = vmatpush1.msra.mxu0 %v446
        %524 = vmatprep.subr.mxu0 %v449
        %525 = vmatpush1.msra.mxu0 %v448
        %526 = vmatprep.subr.mxu0 %v451
        %527 = vmatpush1.msra.mxu0 %v450
        %528 = vmatprep.subr.mxu0 %v453
        %529 = vmatpush1.msra.mxu0 %v452
        %530 = vmatprep.subr.mxu0 %v455
        %531 = vmatpush1.msra.mxu0 %v454
        %532 = vmatprep.subr.mxu0 %v457
        %533 = vmatpush1.msra.mxu0 %v456
        %534 = vmatprep.subr.mxu0 %v459
        %535 = vmatpush1.msra.mxu0 %v458
        %536 = vmatprep.subr.mxu0 %v461
        %537 = vmatpush1.msra.mxu0 %v460
        %538 = vmatprep.subr.mxu0 %v463
        %539 = vmatpush1.msra.mxu0 %v462
        %540 = vmatprep.subr.mxu0 %v465
        %541 = vmatpush1.msra.mxu0 %v464
        %542 = vmatprep.subr.mxu0 %v467
        %543 = vmatpush1.msra.mxu0 %v466
        %544 = vmatprep.subr.mxu0 %v469
        %545 = vmatpush1.msra.mxu0 %v468
        %546 = vmatprep.subr.mxu0 %v471
        %547 = vmatpush1.msra.mxu0 %v470
        %548 = vmatprep.subr.mxu0 %v473
        %549 = vmatpush1.msra.mxu0 %v472
        %550 = vmatprep.subr.mxu0 %v475
        %551 = vmatpush1.msra.mxu0 %v474
        %552 = vmatprep.subr.mxu0 %v477
        %553 = vmatpush1.msra.mxu0 %v476
        %554 = vmatprep.subr.mxu0 %v479
        %555 = vmatpush1.msra.mxu0 %v478
        %556 = vmatprep.subr.mxu0 %v481
        %557 = vmatpush1.msra.mxu0 %v480
        %558 = vmatprep.subr.mxu0 %v483
        %559 = vmatpush1.msra.mxu0 %v482
        %560 = vmatprep.subr.mxu0 %v485
        %561 = vmatpush1.msra.mxu0 %v484
        %562 = vmatprep.subr.mxu0 %v487
        %563 = vmatpush1.msra.mxu0 %v486
        %564 = vmatprep.subr.mxu0 %v489
        %565 = vmatpush1.msra.mxu0 %v488
        %566 = vmatprep.mubr.f32.mxu0 %v423
        %567 = vmatmul.mubr.f32.gmra.mrb[0].mxu0 %v422
        %v568 = vpop.f32.mrb[0].mxu0
        %v569 = vadd.f32 %v495, %v568
        %v570 = vpop.f32.mrb[0].mxu0
        %v571 = vadd.f32 %v499, %v570
        %572 = vmatprep.mubr.f32.mxu0 %v425
        %573 = vmatmul.mubr.f32.gmra.mrb[0].mxu0 %v424
        %v574 = vpop.f32.mrb[0].mxu0
        %v575 = vadd.f32 %v495, %v574
        %v576 = vpop.f32.mrb[0].mxu0
        %v577 = vadd.f32 %v499, %v576
        %578 = vdwg.mxu0
        %v579 = vlaneseq
        %v580 = vshrl.u32 %v579, 7
        %v581 = vadd.s32 %v580, 8
        %v582 = vrot.slane %v569, 7
        %v583 = vrot.slane %v571, 7
        %v584 = vrot.slane %v575, 7
        %v585 = vrot.slane %v577, 7
        %vm586 = vcmp.lt.s32.totalorder %v580, 1
        %v587 = vsel %vm586, %v582, %v584
        %v588 = vsel %vm586, %v583, %v585
        %v589 = vsel %vm586, %v584, %v582
        %v590 = vsel %vm586, %v585, %v583
        %vm591 = vcmp.lt.s32.totalorder %v581, 1
        %v592 = vsel %vm586, 1, 0
        %v593 = vsel %vm591, 1, 0
        %vm594 = vcmp.eq.s32.totalorder %v592, 1
        %vm595 = vcmp.eq.s32.totalorder %v593, 1
        %v596 = vsel %vm594, 0.0, %v589
        %v597 = vsel %vm594, 0.0, %v590
        %v598 = vsel %vm595, 0.0, %v587
        %v599 = vsel %vm595, 0.0, %v588
        %v600 = vld [vmem:[#allocation8] sm:$0xff]
        %v601 = vld [vmem:[#allocation8 + $0x8] sm:$0xff]
        %v602 = vld [vmem:[#allocation8 + $0x10] sm:$0xff]
        %v603 = vld [vmem:[#allocation8 + $0x18] sm:$0xff]
        %v604 = vld [vmem:[#allocation8 + $0x20] sm:$0xff]
        %v605 = vld [vmem:[#allocation8 + $0x28] sm:$0xff]
        %v606 = vld [vmem:[#allocation8 + $0x30] sm:$0xff]
        %v607 = vld [vmem:[#allocation8 + $0x38] sm:$0xff]
        %v608 = vld [vmem:[#allocation8 + $0x40] sm:$0xff]
        %v609 = vld [vmem:[#allocation8 + $0x48] sm:$0xff]
        %v610 = vld [vmem:[#allocation8 + $0x50] sm:$0xff]
        %v611 = vld [vmem:[#allocation8 + $0x58] sm:$0xff]
        %v612 = vld [vmem:[#allocation8 + $0x60] sm:$0xff]
        %v613 = vld [vmem:[#allocation8 + $0x68] sm:$0xff]
        %v614 = vld [vmem:[#allocation8 + $0x70] sm:$0xff]
        %v615 = vld [vmem:[#allocation8 + $0x78] sm:$0xff]
        %v616 = vld [vmem:[#allocation8 + $0x80] sm:$0xff]
        %v617 = vld [vmem:[#allocation8 + $0x88] sm:$0xff]
        %v618 = vld [vmem:[#allocation8 + $0x90] sm:$0xff]
        %v619 = vld [vmem:[#allocation8 + $0x98] sm:$0xff]
        %v620 = vld [vmem:[#allocation8 + $0xa0] sm:$0xff]
        %v621 = vld [vmem:[#allocation8 + $0xa8] sm:$0xff]
        %v622 = vld [vmem:[#allocation8 + $0xb0] sm:$0xff]
        %v623 = vld [vmem:[#allocation8 + $0xb8] sm:$0xff]
        %v624 = vld [vmem:[#allocation8 + $0xc0] sm:$0xff]
        %v625 = vld [vmem:[#allocation8 + $0xc8] sm:$0xff]
        %v626 = vld [vmem:[#allocation8 + $0xd0] sm:$0xff]
        %v627 = vld [vmem:[#allocation8 + $0xd8] sm:$0xff]
        %v628 = vld [vmem:[#allocation8 + $0xe0] sm:$0xff]
        %v629 = vld [vmem:[#allocation8 + $0xe8] sm:$0xff]
        %v630 = vld [vmem:[#allocation8 + $0xf0] sm:$0xff]
        %v631 = vld [vmem:[#allocation8 + $0xf8] sm:$0xff]
        %v632 = vld [vmem:[#allocation8 + $0x100] sm:$0xff]
        %v633 = vld [vmem:[#allocation8 + $0x108] sm:$0xff]
        %v634 = vld [vmem:[#allocation8 + $0x110] sm:$0xff]
        %v635 = vld [vmem:[#allocation8 + $0x118] sm:$0xff]
        %v636 = vld [vmem:[#allocation8 + $0x120] sm:$0xff]
        %v637 = vld [vmem:[#allocation8 + $0x128] sm:$0xff]
        %v638 = vld [vmem:[#allocation8 + $0x130] sm:$0xff]
        %v639 = vld [vmem:[#allocation8 + $0x138] sm:$0xff]
        %v640 = vld [vmem:[#allocation8 + $0x140] sm:$0xff]
        %v641 = vld [vmem:[#allocation8 + $0x148] sm:$0xff]
        %v642 = vld [vmem:[#allocation8 + $0x150] sm:$0xff]
        %v643 = vld [vmem:[#allocation8 + $0x158] sm:$0xff]
        %v644 = vld [vmem:[#allocation8 + $0x160] sm:$0xff]
        %v645 = vld [vmem:[#allocation8 + $0x168] sm:$0xff]
        %v646 = vld [vmem:[#allocation8 + $0x170] sm:$0xff]
        %v647 = vld [vmem:[#allocation8 + $0x178] sm:$0xff]
        %v648 = vld [vmem:[#allocation8 + $0x180] sm:$0xff]
        %v649 = vld [vmem:[#allocation8 + $0x188] sm:$0xff]
        %v650 = vld [vmem:[#allocation8 + $0x190] sm:$0xff]
        %v651 = vld [vmem:[#allocation8 + $0x198] sm:$0xff]
        %v652 = vld [vmem:[#allocation8 + $0x1a0] sm:$0xff]
        %v653 = vld [vmem:[#allocation8 + $0x1a8] sm:$0xff]
        %v654 = vld [vmem:[#allocation8 + $0x1b0] sm:$0xff]
        %v655 = vld [vmem:[#allocation8 + $0x1b8] sm:$0xff]
        %v656 = vld [vmem:[#allocation8 + $0x1c0] sm:$0xff]
        %v657 = vld [vmem:[#allocation8 + $0x1c8] sm:$0xff]
        %v658 = vld [vmem:[#allocation8 + $0x1d0] sm:$0xff]
        %v659 = vld [vmem:[#allocation8 + $0x1d8] sm:$0xff]
        %v660 = vld [vmem:[#allocation8 + $0x1e0] sm:$0xff]
        %v661 = vld [vmem:[#allocation8 + $0x1e8] sm:$0xff]
        %v662 = vld [vmem:[#allocation8 + $0x1f0] sm:$0xff]
        %v663 = vld [vmem:[#allocation8 + $0x1f8] sm:$0xff]
        %s664 = scalar_lea.vmem [#allocation8], 512
        %v665 = vld [vmem:[%s664] sm:$0xff]
        %v666 = vld [vmem:[%s664 + $0x8] sm:$0xff]
        %v667 = vld [vmem:[%s664 + $0x10] sm:$0xff]
        %v668 = vld [vmem:[%s664 + $0x18] sm:$0xff]
        %v669 = vld [vmem:[%s664 + $0x20] sm:$0xff]
        %v670 = vld [vmem:[%s664 + $0x28] sm:$0xff]
        %v671 = vld [vmem:[%s664 + $0x30] sm:$0xff]
        %v672 = vld [vmem:[%s664 + $0x38] sm:$0xff]
        %v673 = vld [vmem:[%s664 + $0x40] sm:$0xff]
        %v674 = vld [vmem:[%s664 + $0x48] sm:$0xff]
        %v675 = vld [vmem:[%s664 + $0x50] sm:$0xff]
        %v676 = vld [vmem:[%s664 + $0x58] sm:$0xff]
        %v677 = vld [vmem:[%s664 + $0x60] sm:$0xff]
        %v678 = vld [vmem:[%s664 + $0x68] sm:$0xff]
        %v679 = vld [vmem:[%s664 + $0x70] sm:$0xff]
        %v680 = vld [vmem:[%s664 + $0x78] sm:$0xff]
        %v681 = vld [vmem:[%s664 + $0x80] sm:$0xff]
        %v682 = vld [vmem:[%s664 + $0x88] sm:$0xff]
        %v683 = vld [vmem:[%s664 + $0x90] sm:$0xff]
        %v684 = vld [vmem:[%s664 + $0x98] sm:$0xff]
        %v685 = vld [vmem:[%s664 + $0xa0] sm:$0xff]
        %v686 = vld [vmem:[%s664 + $0xa8] sm:$0xff]
        %v687 = vld [vmem:[%s664 + $0xb0] sm:$0xff]
        %v688 = vld [vmem:[%s664 + $0xb8] sm:$0xff]
        %v689 = vld [vmem:[%s664 + $0xc0] sm:$0xff]
        %v690 = vld [vmem:[%s664 + $0xc8] sm:$0xff]
        %v691 = vld [vmem:[%s664 + $0xd0] sm:$0xff]
        %v692 = vld [vmem:[%s664 + $0xd8] sm:$0xff]
        %v693 = vld [vmem:[%s664 + $0xe0] sm:$0xff]
        %v694 = vld [vmem:[%s664 + $0xe8] sm:$0xff]
        %v695 = vld [vmem:[%s664 + $0xf0] sm:$0xff]
        %v696 = vld [vmem:[%s664 + $0xf8] sm:$0xff]
        %v697 = vld [vmem:[%s664 + $0x100] sm:$0xff]
        %v698 = vld [vmem:[%s664 + $0x108] sm:$0xff]
        %v699 = vld [vmem:[%s664 + $0x110] sm:$0xff]
        %v700 = vld [vmem:[%s664 + $0x118] sm:$0xff]
        %v701 = vld [vmem:[%s664 + $0x120] sm:$0xff]
        %v702 = vld [vmem:[%s664 + $0x128] sm:$0xff]
        %v703 = vld [vmem:[%s664 + $0x130] sm:$0xff]
        %v704 = vld [vmem:[%s664 + $0x138] sm:$0xff]
        %v705 = vld [vmem:[%s664 + $0x140] sm:$0xff]
        %v706 = vld [vmem:[%s664 + $0x148] sm:$0xff]
        %v707 = vld [vmem:[%s664 + $0x150] sm:$0xff]
        %v708 = vld [vmem:[%s664 + $0x158] sm:$0xff]
        %v709 = vld [vmem:[%s664 + $0x160] sm:$0xff]
        %v710 = vld [vmem:[%s664 + $0x168] sm:$0xff]
        %v711 = vld [vmem:[%s664 + $0x170] sm:$0xff]
        %v712 = vld [vmem:[%s664 + $0x178] sm:$0xff]
        %v713 = vld [vmem:[%s664 + $0x180] sm:$0xff]
        %v714 = vld [vmem:[%s664 + $0x188] sm:$0xff]
        %v715 = vld [vmem:[%s664 + $0x190] sm:$0xff]
        %v716 = vld [vmem:[%s664 + $0x198] sm:$0xff]
        %v717 = vld [vmem:[%s664 + $0x1a0] sm:$0xff]
        %v718 = vld [vmem:[%s664 + $0x1a8] sm:$0xff]
        %v719 = vld [vmem:[%s664 + $0x1b0] sm:$0xff]
        %v720 = vld [vmem:[%s664 + $0x1b8] sm:$0xff]
        %v721 = vld [vmem:[%s664 + $0x1c0] sm:$0xff]
        %v722 = vld [vmem:[%s664 + $0x1c8] sm:$0xff]
        %v723 = vld [vmem:[%s664 + $0x1d0] sm:$0xff]
        %v724 = vld [vmem:[%s664 + $0x1d8] sm:$0xff]
        %v725 = vld [vmem:[%s664 + $0x1e0] sm:$0xff]
        %v726 = vld [vmem:[%s664 + $0x1e8] sm:$0xff]
        %v727 = vld [vmem:[%s664 + $0x1f0] sm:$0xff]
        %v728 = vld [vmem:[%s664 + $0x1f8] sm:$0xff]
        %729 = vmatprep.subr.mxu0 %v666
        %730 = vmatpush1.msra.mxu0 %v665
        %731 = vmatprep.subr.mxu0 %v668
        %732 = vmatpush1.msra.mxu0 %v667
        %733 = vmatprep.subr.mxu0 %v670
        %734 = vmatpush1.msra.mxu0 %v669
        %735 = vmatprep.subr.mxu0 %v672
        %736 = vmatpush1.msra.mxu0 %v671
        %737 = vmatprep.subr.mxu0 %v674
        %738 = vmatpush1.msra.mxu0 %v673
        %739 = vmatprep.subr.mxu0 %v676
        %740 = vmatpush1.msra.mxu0 %v675
        %741 = vmatprep.subr.mxu0 %v678
        %742 = vmatpush1.msra.mxu0 %v677
        %743 = vmatprep.subr.mxu0 %v680
        %744 = vmatpush1.msra.mxu0 %v679
        %745 = vmatprep.subr.mxu0 %v682
        %746 = vmatpush1.msra.mxu0 %v681
        %747 = vmatprep.subr.mxu0 %v684
        %748 = vmatpush1.msra.mxu0 %v683
        %749 = vmatprep.subr.mxu0 %v686
        %750 = vmatpush1.msra.mxu0 %v685
        %751 = vmatprep.subr.mxu0 %v688
        %752 = vmatpush1.msra.mxu0 %v687
        %753 = vmatprep.subr.mxu0 %v690
        %754 = vmatpush1.msra.mxu0 %v689
        %755 = vmatprep.subr.mxu0 %v692
        %756 = vmatpush1.msra.mxu0 %v691
        %757 = vmatprep.subr.mxu0 %v694
        %758 = vmatpush1.msra.mxu0 %v693
        %759 = vmatprep.subr.mxu0 %v696
        %760 = vmatpush1.msra.mxu0 %v695
        %761 = vmatprep.subr.mxu0 %v698
        %762 = vmatpush1.msra.mxu0 %v697
        %763 = vmatprep.subr.mxu0 %v700
        %764 = vmatpush1.msra.mxu0 %v699
        %765 = vmatprep.subr.mxu0 %v702
        %766 = vmatpush1.msra.mxu0 %v701
        %767 = vmatprep.subr.mxu0 %v704
        %768 = vmatpush1.msra.mxu0 %v703
        %769 = vmatprep.subr.mxu0 %v706
        %770 = vmatpush1.msra.mxu0 %v705
        %771 = vmatprep.subr.mxu0 %v708
        %772 = vmatpush1.msra.mxu0 %v707
        %773 = vmatprep.subr.mxu0 %v710
        %774 = vmatpush1.msra.mxu0 %v709
        %775 = vmatprep.subr.mxu0 %v712
        %776 = vmatpush1.msra.mxu0 %v711
        %777 = vmatprep.subr.mxu0 %v714
        %778 = vmatpush1.msra.mxu0 %v713
        %779 = vmatprep.subr.mxu0 %v716
        %780 = vmatpush1.msra.mxu0 %v715
        %781 = vmatprep.subr.mxu0 %v718
        %782 = vmatpush1.msra.mxu0 %v717
        %783 = vmatprep.subr.mxu0 %v720
        %784 = vmatpush1.msra.mxu0 %v719
        %785 = vmatprep.subr.mxu0 %v722
        %786 = vmatpush1.msra.mxu0 %v721
        %787 = vmatprep.subr.mxu0 %v724
        %788 = vmatpush1.msra.mxu0 %v723
        %789 = vmatprep.subr.mxu0 %v726
        %790 = vmatpush1.msra.mxu0 %v725
        %791 = vmatprep.subr.mxu0 %v728
        %792 = vmatpush1.msra.mxu0 %v727
        %793 = vmatprep.mubr.f32.mxu0 %v571
        %794 = vmatmul.mubr.f32.gmra.mrb[0].mxu0 %v569
        %v795 = vpop.f32.mrb[0].mxu0
        %v796 = vadd.f32 0.0, %v795
        %v797 = vpop.f32.mrb[0].mxu0
        %v798 = vadd.f32 0.0, %v797
        %799 = vmatprep.mubr.f32.mxu0 %v577
        %800 = vmatmul.mubr.f32.gmra.mrb[0].mxu0 %v575
        %v801 = vpop.f32.mrb[0].mxu0
        %v802 = vadd.f32 0.0, %v801
        %v803 = vpop.f32.mrb[0].mxu0
        %v804 = vadd.f32 0.0, %v803
        %805 = vdwg.mxu0
        %806 = vmatprep.subr.mxu0 %v601
        %807 = vmatpush1.msra.mxu0 %v600
        %808 = vmatprep.subr.mxu0 %v603
        %809 = vmatpush1.msra.mxu0 %v602
        %810 = vmatprep.subr.mxu0 %v605
        %811 = vmatpush1.msra.mxu0 %v604
        %812 = vmatprep.subr.mxu0 %v607
        %813 = vmatpush1.msra.mxu0 %v606
        %814 = vmatprep.subr.mxu0 %v609
        %815 = vmatpush1.msra.mxu0 %v608
        %816 = vmatprep.subr.mxu0 %v611
        %817 = vmatpush1.msra.mxu0 %v610
        %818 = vmatprep.subr.mxu0 %v613
        %819 = vmatpush1.msra.mxu0 %v612
        %820 = vmatprep.subr.mxu0 %v615
        %821 = vmatpush1.msra.mxu0 %v614
        %822 = vmatprep.subr.mxu0 %v617
        %823 = vmatpush1.msra.mxu0 %v616
        %824 = vmatprep.subr.mxu0 %v619
        %825 = vmatpush1.msra.mxu0 %v618
        %826 = vmatprep.subr.mxu0 %v621
        %827 = vmatpush1.msra.mxu0 %v620
        %828 = vmatprep.subr.mxu0 %v623
        %829 = vmatpush1.msra.mxu0 %v622
        %830 = vmatprep.subr.mxu0 %v625
        %831 = vmatpush1.msra.mxu0 %v624
        %832 = vmatprep.subr.mxu0 %v627
        %833 = vmatpush1.msra.mxu0 %v626
        %834 = vmatprep.subr.mxu0 %v629
        %835 = vmatpush1.msra.mxu0 %v628
        %836 = vmatprep.subr.mxu0 %v631
        %837 = vmatpush1.msra.mxu0 %v630
        %838 = vmatprep.subr.mxu0 %v633
        %839 = vmatpush1.msra.mxu0 %v632
        %840 = vmatprep.subr.mxu0 %v635
        %841 = vmatpush1.msra.mxu0 %v634
        %842 = vmatprep.subr.mxu0 %v637
        %843 = vmatpush1.msra.mxu0 %v636
        %844 = vmatprep.subr.mxu0 %v639
        %845 = vmatpush1.msra.mxu0 %v638
        %846 = vmatprep.subr.mxu0 %v641
        %847 = vmatpush1.msra.mxu0 %v640
        %848 = vmatprep.subr.mxu0 %v643
        %849 = vmatpush1.msra.mxu0 %v642
        %850 = vmatprep.subr.mxu0 %v645
        %851 = vmatpush1.msra.mxu0 %v644
        %852 = vmatprep.subr.mxu0 %v647
        %853 = vmatpush1.msra.mxu0 %v646
        %854 = vmatprep.subr.mxu0 %v649
        %855 = vmatpush1.msra.mxu0 %v648
        %856 = vmatprep.subr.mxu0 %v651
        %857 = vmatpush1.msra.mxu0 %v650
        %858 = vmatprep.subr.mxu0 %v653
        %859 = vmatpush1.msra.mxu0 %v652
        %860 = vmatprep.subr.mxu0 %v655
        %861 = vmatpush1.msra.mxu0 %v654
        %862 = vmatprep.subr.mxu0 %v657
        %863 = vmatpush1.msra.mxu0 %v656
        %864 = vmatprep.subr.mxu0 %v659
        %865 = vmatpush1.msra.mxu0 %v658
        %866 = vmatprep.subr.mxu0 %v661
        %867 = vmatpush1.msra.mxu0 %v660
        %868 = vmatprep.subr.mxu0 %v663
        %869 = vmatpush1.msra.mxu0 %v662
        %870 = vmatprep.mubr.f32.mxu0 %v597
        %871 = vmatmul.mubr.f32.gmra.mrb[0].mxu0 %v596
        %v872 = vpop.f32.mrb[0].mxu0
        %v873 = vadd.f32 %v796, %v872
        %v874 = vpop.f32.mrb[0].mxu0
        %v875 = vadd.f32 %v798, %v874
        %876 = vmatprep.mubr.f32.mxu0 %v599
        %877 = vmatmul.mubr.f32.gmra.mrb[0].mxu0 %v598
        %v878 = vpop.f32.mrb[0].mxu0
        %v879 = vadd.f32 %v802, %v878
        %v880 = vpop.f32.mrb[0].mxu0
        %v881 = vadd.f32 %v804, %v880
        %882 = vdwg.mxu0
        %v883 = vrot.slane %v569, 1
        %v884 = vrot.slane %v571, 1
        %v885 = vrot.slane %v575, 1
        %v886 = vrot.slane %v577, 1
        %vm887 = vcmp.lt.s32.totalorder %v580, 7
        %v888 = vsel %vm887, %v883, %v885
        %v889 = vsel %vm887, %v884, %v886
        %v890 = vsel %vm887, %v885, %v883
        %v891 = vsel %vm887, %v886, %v884
        %vm892 = vcmp.ge.s32.totalorder %v580, 15
        %vm893 = vcmp.ge.s32.totalorder %v581, 15
        %v894 = vsel %vm892, 1, 0
        %v895 = vsel %vm893, 1, 0
        %vm896 = vcmp.eq.s32.totalorder %v894, 1
        %vm897 = vcmp.eq.s32.totalorder %v895, 1
        %v898 = vsel %vm896, 0.0, %v888
        %v899 = vsel %vm896, 0.0, %v889
        %v900 = vsel %vm897, 0.0, %v890
        %v901 = vsel %vm897, 0.0, %v891
        %s902 = scalar_lea.vmem [#allocation8], 1024
        %v903 = vld [vmem:[%s902] sm:$0xff]
        %v904 = vld [vmem:[%s902 + $0x8] sm:$0xff]
        %v905 = vld [vmem:[%s902 + $0x10] sm:$0xff]
        %v906 = vld [vmem:[%s902 + $0x18] sm:$0xff]
        %v907 = vld [vmem:[%s902 + $0x20] sm:$0xff]
        %v908 = vld [vmem:[%s902 + $0x28] sm:$0xff]
        %v909 = vld [vmem:[%s902 + $0x30] sm:$0xff]
        %v910 = vld [vmem:[%s902 + $0x38] sm:$0xff]
        %v911 = vld [vmem:[%s902 + $0x40] sm:$0xff]
        %v912 = vld [vmem:[%s902 + $0x48] sm:$0xff]
        %v913 = vld [vmem:[%s902 + $0x50] sm:$0xff]
        %v914 = vld [vmem:[%s902 + $0x58] sm:$0xff]
        %v915 = vld [vmem:[%s902 + $0x60] sm:$0xff]
        %v916 = vld [vmem:[%s902 + $0x68] sm:$0xff]
        %v917 = vld [vmem:[%s902 + $0x70] sm:$0xff]
        %v918 = vld [vmem:[%s902 + $0x78] sm:$0xff]
        %v919 = vld [vmem:[%s902 + $0x80] sm:$0xff]
        %v920 = vld [vmem:[%s902 + $0x88] sm:$0xff]
        %v921 = vld [vmem:[%s902 + $0x90] sm:$0xff]
        %v922 = vld [vmem:[%s902 + $0x98] sm:$0xff]
        %v923 = vld [vmem:[%s902 + $0xa0] sm:$0xff]
        %v924 = vld [vmem:[%s902 + $0xa8] sm:$0xff]
        %v925 = vld [vmem:[%s902 + $0xb0] sm:$0xff]
        %v926 = vld [vmem:[%s902 + $0xb8] sm:$0xff]
        %v927 = vld [vmem:[%s902 + $0xc0] sm:$0xff]
        %v928 = vld [vmem:[%s902 + $0xc8] sm:$0xff]
        %v929 = vld [vmem:[%s902 + $0xd0] sm:$0xff]
        %v930 = vld [vmem:[%s902 + $0xd8] sm:$0xff]
        %v931 = vld [vmem:[%s902 + $0xe0] sm:$0xff]
        %v932 = vld [vmem:[%s902 + $0xe8] sm:$0xff]
        %v933 = vld [vmem:[%s902 + $0xf0] sm:$0xff]
        %v934 = vld [vmem:[%s902 + $0xf8] sm:$0xff]
        %v935 = vld [vmem:[%s902 + $0x100] sm:$0xff]
        %v936 = vld [vmem:[%s902 + $0x108] sm:$0xff]
        %v937 = vld [vmem:[%s902 + $0x110] sm:$0xff]
        %v938 = vld [vmem:[%s902 + $0x118] sm:$0xff]
        %v939 = vld [vmem:[%s902 + $0x120] sm:$0xff]
        %v940 = vld [vmem:[%s902 + $0x128] sm:$0xff]
        %v941 = vld [vmem:[%s902 + $0x130] sm:$0xff]
        %v942 = vld [vmem:[%s902 + $0x138] sm:$0xff]
        %v943 = vld [vmem:[%s902 + $0x140] sm:$0xff]
        %v944 = vld [vmem:[%s902 + $0x148] sm:$0xff]
        %v945 = vld [vmem:[%s902 + $0x150] sm:$0xff]
        %v946 = vld [vmem:[%s902 + $0x158] sm:$0xff]
        %v947 = vld [vmem:[%s902 + $0x160] sm:$0xff]
        %v948 = vld [vmem:[%s902 + $0x168] sm:$0xff]
        %v949 = vld [vmem:[%s902 + $0x170] sm:$0xff]
        %v950 = vld [vmem:[%s902 + $0x178] sm:$0xff]
        %v951 = vld [vmem:[%s902 + $0x180] sm:$0xff]
        %v952 = vld [vmem:[%s902 + $0x188] sm:$0xff]
        %v953 = vld [vmem:[%s902 + $0x190] sm:$0xff]
        %v954 = vld [vmem:[%s902 + $0x198] sm:$0xff]
        %v955 = vld [vmem:[%s902 + $0x1a0] sm:$0xff]
        %v956 = vld [vmem:[%s902 + $0x1a8] sm:$0xff]
        %v957 = vld [vmem:[%s902 + $0x1b0] sm:$0xff]
        %v958 = vld [vmem:[%s902 + $0x1b8] sm:$0xff]
        %v959 = vld [vmem:[%s902 + $0x1c0] sm:$0xff]
        %v960 = vld [vmem:[%s902 + $0x1c8] sm:$0xff]
        %v961 = vld [vmem:[%s902 + $0x1d0] sm:$0xff]
        %v962 = vld [vmem:[%s902 + $0x1d8] sm:$0xff]
        %v963 = vld [vmem:[%s902 + $0x1e0] sm:$0xff]
        %v964 = vld [vmem:[%s902 + $0x1e8] sm:$0xff]
        %v965 = vld [vmem:[%s902 + $0x1f0] sm:$0xff]
        %v966 = vld [vmem:[%s902 + $0x1f8] sm:$0xff]
        %967 = vmatprep.subr.mxu0 %v904
        %968 = vmatpush1.msra.mxu0 %v903
        %969 = vmatprep.subr.mxu0 %v906
        %970 = vmatpush1.msra.mxu0 %v905
        %971 = vmatprep.subr.mxu0 %v908
        %972 = vmatpush1.msra.mxu0 %v907
        %973 = vmatprep.subr.mxu0 %v910
        %974 = vmatpush1.msra.mxu0 %v909
        %975 = vmatprep.subr.mxu0 %v912
        %976 = vmatpush1.msra.mxu0 %v911
        %977 = vmatprep.subr.mxu0 %v914
        %978 = vmatpush1.msra.mxu0 %v913
        %979 = vmatprep.subr.mxu0 %v916
        %980 = vmatpush1.msra.mxu0 %v915
        %981 = vmatprep.subr.mxu0 %v918
        %982 = vmatpush1.msra.mxu0 %v917
        %983 = vmatprep.subr.mxu0 %v920
        %984 = vmatpush1.msra.mxu0 %v919
        %985 = vmatprep.subr.mxu0 %v922
        %986 = vmatpush1.msra.mxu0 %v921
        %987 = vmatprep.subr.mxu0 %v924
        %988 = vmatpush1.msra.mxu0 %v923
        %989 = vmatprep.subr.mxu0 %v926
        %990 = vmatpush1.msra.mxu0 %v925
        %991 = vmatprep.subr.mxu0 %v928
        %992 = vmatpush1.msra.mxu0 %v927
        %993 = vmatprep.subr.mxu0 %v930
        %994 = vmatpush1.msra.mxu0 %v929
        %995 = vmatprep.subr.mxu0 %v932
        %996 = vmatpush1.msra.mxu0 %v931
        %997 = vmatprep.subr.mxu0 %v934
        %998 = vmatpush1.msra.mxu0 %v933
        %999 = vmatprep.subr.mxu0 %v936
        %1000 = vmatpush1.msra.mxu0 %v935
        %1001 = vmatprep.subr.mxu0 %v938
        %1002 = vmatpush1.msra.mxu0 %v937
        %1003 = vmatprep.subr.mxu0 %v940
        %1004 = vmatpush1.msra.mxu0 %v939
        %1005 = vmatprep.subr.mxu0 %v942
        %1006 = vmatpush1.msra.mxu0 %v941
        %1007 = vmatprep.subr.mxu0 %v944
        %1008 = vmatpush1.msra.mxu0 %v943
        %1009 = vmatprep.subr.mxu0 %v946
        %1010 = vmatpush1.msra.mxu0 %v945
        %1011 = vmatprep.subr.mxu0 %v948
        %1012 = vmatpush1.msra.mxu0 %v947
        %1013 = vmatprep.subr.mxu0 %v950
        %1014 = vmatpush1.msra.mxu0 %v949
        %1015 = vmatprep.subr.mxu0 %v952
        %1016 = vmatpush1.msra.mxu0 %v951
        %1017 = vmatprep.subr.mxu0 %v954
        %1018 = vmatpush1.msra.mxu0 %v953
        %1019 = vmatprep.subr.mxu0 %v956
        %1020 = vmatpush1.msra.mxu0 %v955
        %1021 = vmatprep.subr.mxu0 %v958
        %1022 = vmatpush1.msra.mxu0 %v957
        %1023 = vmatprep.subr.mxu0 %v960
        %1024 = vmatpush1.msra.mxu0 %v959
        %1025 = vmatprep.subr.mxu0 %v962
        %1026 = vmatpush1.msra.mxu0 %v961
        %1027 = vmatprep.subr.mxu0 %v964
        %1028 = vmatpush1.msra.mxu0 %v963
        %1029 = vmatprep.subr.mxu0 %v966
        %1030 = vmatpush1.msra.mxu0 %v965
        %1031 = vmatprep.mubr.f32.mxu0 %v899
        %1032 = vmatmul.mubr.f32.gmra.mrb[0].mxu0 %v898
        %v1033 = vpop.f32.mrb[0].mxu0
        %v1034 = vadd.f32 0.0, %v1033
        %v1035 = vpop.f32.mrb[0].mxu0
        %v1036 = vadd.f32 0.0, %v1035
        %1037 = vmatprep.mubr.f32.mxu0 %v901
        %1038 = vmatmul.mubr.f32.gmra.mrb[0].mxu0 %v900
        %v1039 = vpop.f32.mrb[0].mxu0
        %v1040 = vadd.f32 0.0, %v1039
        %v1041 = vpop.f32.mrb[0].mxu0
        %v1042 = vadd.f32 0.0, %v1041
        %1043 = vdwg.mxu0
        %v1044 = vadd.f32 %v873, %v1034
        %v1045 = vadd.f32 %v875, %v1036
        %v1046 = vadd.f32 %v879, %v1040
        %v1047 = vadd.f32 %v881, %v1042
        %v1048 = vld [vmem:[#allocation10] sm:$0x3]
        %v1050 = vlaneseq
        %v1051 = vshrl.u32 %v1050, 7
        %v1052 = vsub.s32 0, %v1051
        %v1053 = vrot.slane %v1048, %v1052
        %v1054 = vlaneseq
        %v1055 = vshrl.u32 %v1054, 7
        %v1056 = vsub.s32 1, %v1055
        %v1057 = vrot.slane %v1048, %v1056
        %v1060 = vmul.f32 %v1044, %v1053
        %v1061 = vmul.f32 %v1045, %v1057
        %v1062 = vmul.f32 %v1046, %v1053
        %v1063 = vmul.f32 %v1047, %v1057
        %v1064 = vld [vmem:[#allocation11] sm:$0x3]
        %v1066 = vlaneseq
        %v1067 = vshrl.u32 %v1066, 7
        %v1068 = vsub.s32 0, %v1067
        %v1069 = vrot.slane %v1064, %v1068
        %v1070 = vlaneseq
        %v1071 = vshrl.u32 %v1070, 7
        %v1072 = vsub.s32 1, %v1071
        %v1073 = vrot.slane %v1064, %v1072
        %v1076 = vadd.f32 %v1060, %v1069
        %v1077 = vadd.f32 %v1061, %v1073
        %v1078 = vadd.f32 %v1062, %v1069
        %v1079 = vadd.f32 %v1063, %v1073
        %v1080 = vmax.f32 %v1076, 0.0
        %v1081 = vmax.f32 %v1077, 0.0
        %v1082 = vmax.f32 %v1078, 0.0
        %v1083 = vmax.f32 %v1079, 0.0
        %v1084 = vrot.slane %v1080, 7
        %v1085 = vrot.slane %v1081, 7
        %v1086 = vrot.slane %v1082, 7
        %v1087 = vrot.slane %v1083, 7
        %v1088 = vsel %vm586, %v1084, %v1086
        %v1089 = vsel %vm586, %v1085, %v1087
        %v1090 = vsel %vm586, %v1086, %v1084
        %v1091 = vsel %vm586, %v1087, %v1085
        %v1092 = vsel %vm594, 0.0, %v1090
        %v1093 = vsel %vm594, 0.0, %v1091
        %v1094 = vsel %vm595, 0.0, %v1088
        %v1095 = vsel %vm595, 0.0, %v1089
        %s1096 = scalar_lea.vmem [#allocation8], 1536
        %v1097 = vld [vmem:[%s1096] sm:$0xff]
        %v1098 = vld [vmem:[%s1096 + $0x8] sm:$0xff]
        %v1099 = vld [vmem:[%s1096 + $0x10] sm:$0xff]
        %v1100 = vld [vmem:[%s1096 + $0x18] sm:$0xff]
        %v1101 = vld [vmem:[%s1096 + $0x20] sm:$0xff]
        %v1102 = vld [vmem:[%s1096 + $0x28] sm:$0xff]
        %v1103 = vld [vmem:[%s1096 + $0x30] sm:$0xff]
        %v1104 = vld [vmem:[%s1096 + $0x38] sm:$0xff]
        %v1105 = vld [vmem:[%s1096 + $0x40] sm:$0xff]
        %v1106 = vld [vmem:[%s1096 + $0x48] sm:$0xff]
        %v1107 = vld [vmem:[%s1096 + $0x50] sm:$0xff]
        %v1108 = vld [vmem:[%s1096 + $0x58] sm:$0xff]
        %v1109 = vld [vmem:[%s1096 + $0x60] sm:$0xff]
        %v1110 = vld [vmem:[%s1096 + $0x68] sm:$0xff]
        %v1111 = vld [vmem:[%s1096 + $0x70] sm:$0xff]
        %v1112 = vld [vmem:[%s1096 + $0x78] sm:$0xff]
        %v1113 = vld [vmem:[%s1096 + $0x80] sm:$0xff]
        %v1114 = vld [vmem:[%s1096 + $0x88] sm:$0xff]
        %v1115 = vld [vmem:[%s1096 + $0x90] sm:$0xff]
        %v1116 = vld [vmem:[%s1096 + $0x98] sm:$0xff]
        %v1117 = vld [vmem:[%s1096 + $0xa0] sm:$0xff]
        %v1118 = vld [vmem:[%s1096 + $0xa8] sm:$0xff]
        %v1119 = vld [vmem:[%s1096 + $0xb0] sm:$0xff]
        %v1120 = vld [vmem:[%s1096 + $0xb8] sm:$0xff]
        %v1121 = vld [vmem:[%s1096 + $0xc0] sm:$0xff]
        %v1122 = vld [vmem:[%s1096 + $0xc8] sm:$0xff]
        %v1123 = vld [vmem:[%s1096 + $0xd0] sm:$0xff]
        %v1124 = vld [vmem:[%s1096 + $0xd8] sm:$0xff]
        %v1125 = vld [vmem:[%s1096 + $0xe0] sm:$0xff]
        %v1126 = vld [vmem:[%s1096 + $0xe8] sm:$0xff]
        %v1127 = vld [vmem:[%s1096 + $0xf0] sm:$0xff]
        %v1128 = vld [vmem:[%s1096 + $0xf8] sm:$0xff]
        %v1129 = vld [vmem:[%s1096 + $0x100] sm:$0xff]
        %v1130 = vld [vmem:[%s1096 + $0x108] sm:$0xff]
        %v1131 = vld [vmem:[%s1096 + $0x110] sm:$0xff]
        %v1132 = vld [vmem:[%s1096 + $0x118] sm:$0xff]
        %v1133 = vld [vmem:[%s1096 + $0x120] sm:$0xff]
        %v1134 = vld [vmem:[%s1096 + $0x128] sm:$0xff]
        %v1135 = vld [vmem:[%s1096 + $0x130] sm:$0xff]
        %v1136 = vld [vmem:[%s1096 + $0x138] sm:$0xff]
        %v1137 = vld [vmem:[%s1096 + $0x140] sm:$0xff]
        %v1138 = vld [vmem:[%s1096 + $0x148] sm:$0xff]
        %v1139 = vld [vmem:[%s1096 + $0x150] sm:$0xff]
        %v1140 = vld [vmem:[%s1096 + $0x158] sm:$0xff]
        %v1141 = vld [vmem:[%s1096 + $0x160] sm:$0xff]
        %v1142 = vld [vmem:[%s1096 + $0x168] sm:$0xff]
        %v1143 = vld [vmem:[%s1096 + $0x170] sm:$0xff]
        %v1144 = vld [vmem:[%s1096 + $0x178] sm:$0xff]
        %v1145 = vld [vmem:[%s1096 + $0x180] sm:$0xff]
        %v1146 = vld [vmem:[%s1096 + $0x188] sm:$0xff]
        %v1147 = vld [vmem:[%s1096 + $0x190] sm:$0xff]
        %v1148 = vld [vmem:[%s1096 + $0x198] sm:$0xff]
        %v1149 = vld [vmem:[%s1096 + $0x1a0] sm:$0xff]
        %v1150 = vld [vmem:[%s1096 + $0x1a8] sm:$0xff]
        %v1151 = vld [vmem:[%s1096 + $0x1b0] sm:$0xff]
        %v1152 = vld [vmem:[%s1096 + $0x1b8] sm:$0xff]
        %v1153 = vld [vmem:[%s1096 + $0x1c0] sm:$0xff]
        %v1154 = vld [vmem:[%s1096 + $0x1c8] sm:$0xff]
        %v1155 = vld [vmem:[%s1096 + $0x1d0] sm:$0xff]
        %v1156 = vld [vmem:[%s1096 + $0x1d8] sm:$0xff]
        %v1157 = vld [vmem:[%s1096 + $0x1e0] sm:$0xff]
        %v1158 = vld [vmem:[%s1096 + $0x1e8] sm:$0xff]
        %v1159 = vld [vmem:[%s1096 + $0x1f0] sm:$0xff]
        %v1160 = vld [vmem:[%s1096 + $0x1f8] sm:$0xff]
        %s1161 = scalar_lea.vmem [#allocation8], 2048
        %v1162 = vld [vmem:[%s1161] sm:$0xff]
        %v1163 = vld [vmem:[%s1161 + $0x8] sm:$0xff]
        %v1164 = vld [vmem:[%s1161 + $0x10] sm:$0xff]
        %v1165 = vld [vmem:[%s1161 + $0x18] sm:$0xff]
        %v1166 = vld [vmem:[%s1161 + $0x20] sm:$0xff]
        %v1167 = vld [vmem:[%s1161 + $0x28] sm:$0xff]
        %v1168 = vld [vmem:[%s1161 + $0x30] sm:$0xff]
        %v1169 = vld [vmem:[%s1161 + $0x38] sm:$0xff]
        %v1170 = vld [vmem:[%s1161 + $0x40] sm:$0xff]
        %v1171 = vld [vmem:[%s1161 + $0x48] sm:$0xff]
        %v1172 = vld [vmem:[%s1161 + $0x50] sm:$0xff]
        %v1173 = vld [vmem:[%s1161 + $0x58] sm:$0xff]
        %v1174 = vld [vmem:[%s1161 + $0x60] sm:$0xff]
        %v1175 = vld [vmem:[%s1161 + $0x68] sm:$0xff]
        %v1176 = vld [vmem:[%s1161 + $0x70] sm:$0xff]
        %v1177 = vld [vmem:[%s1161 + $0x78] sm:$0xff]
        %v1178 = vld [vmem:[%s1161 + $0x80] sm:$0xff]
        %v1179 = vld [vmem:[%s1161 + $0x88] sm:$0xff]
        %v1180 = vld [vmem:[%s1161 + $0x90] sm:$0xff]
        %v1181 = vld [vmem:[%s1161 + $0x98] sm:$0xff]
        %v1182 = vld [vmem:[%s1161 + $0xa0] sm:$0xff]
        %v1183 = vld [vmem:[%s1161 + $0xa8] sm:$0xff]
        %v1184 = vld [vmem:[%s1161 + $0xb0] sm:$0xff]
        %v1185 = vld [vmem:[%s1161 + $0xb8] sm:$0xff]
        %v1186 = vld [vmem:[%s1161 + $0xc0] sm:$0xff]
        %v1187 = vld [vmem:[%s1161 + $0xc8] sm:$0xff]
        %v1188 = vld [vmem:[%s1161 + $0xd0] sm:$0xff]
        %v1189 = vld [vmem:[%s1161 + $0xd8] sm:$0xff]
        %v1190 = vld [vmem:[%s1161 + $0xe0] sm:$0xff]
        %v1191 = vld [vmem:[%s1161 + $0xe8] sm:$0xff]
        %v1192 = vld [vmem:[%s1161 + $0xf0] sm:$0xff]
        %v1193 = vld [vmem:[%s1161 + $0xf8] sm:$0xff]
        %v1194 = vld [vmem:[%s1161 + $0x100] sm:$0xff]
        %v1195 = vld [vmem:[%s1161 + $0x108] sm:$0xff]
        %v1196 = vld [vmem:[%s1161 + $0x110] sm:$0xff]
        %v1197 = vld [vmem:[%s1161 + $0x118] sm:$0xff]
        %v1198 = vld [vmem:[%s1161 + $0x120] sm:$0xff]
        %v1199 = vld [vmem:[%s1161 + $0x128] sm:$0xff]
        %v1200 = vld [vmem:[%s1161 + $0x130] sm:$0xff]
        %v1201 = vld [vmem:[%s1161 + $0x138] sm:$0xff]
        %v1202 = vld [vmem:[%s1161 + $0x140] sm:$0xff]
        %v1203 = vld [vmem:[%s1161 + $0x148] sm:$0xff]
        %v1204 = vld [vmem:[%s1161 + $0x150] sm:$0xff]
        %v1205 = vld [vmem:[%s1161 + $0x158] sm:$0xff]
        %v1206 = vld [vmem:[%s1161 + $0x160] sm:$0xff]
        %v1207 = vld [vmem:[%s1161 + $0x168] sm:$0xff]
        %v1208 = vld [vmem:[%s1161 + $0x170] sm:$0xff]
        %v1209 = vld [vmem:[%s1161 + $0x178] sm:$0xff]
        %v1210 = vld [vmem:[%s1161 + $0x180] sm:$0xff]
        %v1211 = vld [vmem:[%s1161 + $0x188] sm:$0xff]
        %v1212 = vld [vmem:[%s1161 + $0x190] sm:$0xff]
        %v1213 = vld [vmem:[%s1161 + $0x198] sm:$0xff]
        %v1214 = vld [vmem:[%s1161 + $0x1a0] sm:$0xff]
        %v1215 = vld [vmem:[%s1161 + $0x1a8] sm:$0xff]
        %v1216 = vld [vmem:[%s1161 + $0x1b0] sm:$0xff]
        %v1217 = vld [vmem:[%s1161 + $0x1b8] sm:$0xff]
        %v1218 = vld [vmem:[%s1161 + $0x1c0] sm:$0xff]
        %v1219 = vld [vmem:[%s1161 + $0x1c8] sm:$0xff]
        %v1220 = vld [vmem:[%s1161 + $0x1d0] sm:$0xff]
        %v1221 = vld [vmem:[%s1161 + $0x1d8] sm:$0xff]
        %v1222 = vld [vmem:[%s1161 + $0x1e0] sm:$0xff]
        %v1223 = vld [vmem:[%s1161 + $0x1e8] sm:$0xff]
        %v1224 = vld [vmem:[%s1161 + $0x1f0] sm:$0xff]
        %v1225 = vld [vmem:[%s1161 + $0x1f8] sm:$0xff]
        %1226 = vmatprep.subr.mxu0 %v1163
        %1227 = vmatpush1.msra.mxu0 %v1162
        %1228 = vmatprep.subr.mxu0 %v1165
        %1229 = vmatpush1.msra.mxu0 %v1164
        %1230 = vmatprep.subr.mxu0 %v1167
        %1231 = vmatpush1.msra.mxu0 %v1166
        %1232 = vmatprep.subr.mxu0 %v1169
        %1233 = vmatpush1.msra.mxu0 %v1168
        %1234 = vmatprep.subr.mxu0 %v1171
        %1235 = vmatpush1.msra.mxu0 %v1170
        %1236 = vmatprep.subr.mxu0 %v1173
        %1237 = vmatpush1.msra.mxu0 %v1172
        %1238 = vmatprep.subr.mxu0 %v1175
        %1239 = vmatpush1.msra.mxu0 %v1174
        %1240 = vmatprep.subr.mxu0 %v1177
        %1241 = vmatpush1.msra.mxu0 %v1176
        %1242 = vmatprep.subr.mxu0 %v1179
        %1243 = vmatpush1.msra.mxu0 %v1178
        %1244 = vmatprep.subr.mxu0 %v1181
        %1245 = vmatpush1.msra.mxu0 %v1180
        %1246 = vmatprep.subr.mxu0 %v1183
        %1247 = vmatpush1.msra.mxu0 %v1182
        %1248 = vmatprep.subr.mxu0 %v1185
        %1249 = vmatpush1.msra.mxu0 %v1184
        %1250 = vmatprep.subr.mxu0 %v1187
        %1251 = vmatpush1.msra.mxu0 %v1186
        %1252 = vmatprep.subr.mxu0 %v1189
        %1253 = vmatpush1.msra.mxu0 %v1188
        %1254 = vmatprep.subr.mxu0 %v1191
        %1255 = vmatpush1.msra.mxu0 %v1190
        %1256 = vmatprep.subr.mxu0 %v1193
        %1257 = vmatpush1.msra.mxu0 %v1192
        %1258 = vmatprep.subr.mxu0 %v1195
        %1259 = vmatpush1.msra.mxu0 %v1194
        %1260 = vmatprep.subr.mxu0 %v1197
        %1261 = vmatpush1.msra.mxu0 %v1196
        %1262 = vmatprep.subr.mxu0 %v1199
        %1263 = vmatpush1.msra.mxu0 %v1198
        %1264 = vmatprep.subr.mxu0 %v1201
        %1265 = vmatpush1.msra.mxu0 %v1200
        %1266 = vmatprep.subr.mxu0 %v1203
        %1267 = vmatpush1.msra.mxu0 %v1202
        %1268 = vmatprep.subr.mxu0 %v1205
        %1269 = vmatpush1.msra.mxu0 %v1204
        %1270 = vmatprep.subr.mxu0 %v1207
        %1271 = vmatpush1.msra.mxu0 %v1206
        %1272 = vmatprep.subr.mxu0 %v1209
        %1273 = vmatpush1.msra.mxu0 %v1208
        %1274 = vmatprep.subr.mxu0 %v1211
        %1275 = vmatpush1.msra.mxu0 %v1210
        %1276 = vmatprep.subr.mxu0 %v1213
        %1277 = vmatpush1.msra.mxu0 %v1212
        %1278 = vmatprep.subr.mxu0 %v1215
        %1279 = vmatpush1.msra.mxu0 %v1214
        %1280 = vmatprep.subr.mxu0 %v1217
        %1281 = vmatpush1.msra.mxu0 %v1216
        %1282 = vmatprep.subr.mxu0 %v1219
        %1283 = vmatpush1.msra.mxu0 %v1218
        %1284 = vmatprep.subr.mxu0 %v1221
        %1285 = vmatpush1.msra.mxu0 %v1220
        %1286 = vmatprep.subr.mxu0 %v1223
        %1287 = vmatpush1.msra.mxu0 %v1222
        %1288 = vmatprep.subr.mxu0 %v1225
        %1289 = vmatpush1.msra.mxu0 %v1224
        %1290 = vmatprep.mubr.f32.mxu0 %v1081
        %1291 = vmatmul.mubr.f32.gmra.mrb[0].mxu0 %v1080
        %v1292 = vpop.f32.mrb[0].mxu0
        %v1293 = vadd.f32 0.0, %v1292
        %v1294 = vpop.f32.mrb[0].mxu0
        %v1295 = vadd.f32 0.0, %v1294
        %1296 = vmatprep.mubr.f32.mxu0 %v1083
        %1297 = vmatmul.mubr.f32.gmra.mrb[0].mxu0 %v1082
        %v1298 = vpop.f32.mrb[0].mxu0
        %v1299 = vadd.f32 0.0, %v1298
        %v1300 = vpop.f32.mrb[0].mxu0
        %v1301 = vadd.f32 0.0, %v1300
        %1302 = vdwg.mxu0
        %1303 = vmatprep.subr.mxu0 %v1098
        %1304 = vmatpush1.msra.mxu0 %v1097
        %1305 = vmatprep.subr.mxu0 %v1100
        %1306 = vmatpush1.msra.mxu0 %v1099
        %1307 = vmatprep.subr.mxu0 %v1102
        %1308 = vmatpush1.msra.mxu0 %v1101
        %1309 = vmatprep.subr.mxu0 %v1104
        %1310 = vmatpush1.msra.mxu0 %v1103
        %1311 = vmatprep.subr.mxu0 %v1106
        %1312 = vmatpush1.msra.mxu0 %v1105
        %1313 = vmatprep.subr.mxu0 %v1108
        %1314 = vmatpush1.msra.mxu0 %v1107
        %1315 = vmatprep.subr.mxu0 %v1110
        %1316 = vmatpush1.msra.mxu0 %v1109
        %1317 = vmatprep.subr.mxu0 %v1112
        %1318 = vmatpush1.msra.mxu0 %v1111
        %1319 = vmatprep.subr.mxu0 %v1114
        %1320 = vmatpush1.msra.mxu0 %v1113
        %1321 = vmatprep.subr.mxu0 %v1116
        %1322 = vmatpush1.msra.mxu0 %v1115
        %1323 = vmatprep.subr.mxu0 %v1118
        %1324 = vmatpush1.msra.mxu0 %v1117
        %1325 = vmatprep.subr.mxu0 %v1120
        %1326 = vmatpush1.msra.mxu0 %v1119
        %1327 = vmatprep.subr.mxu0 %v1122
        %1328 = vmatpush1.msra.mxu0 %v1121
        %1329 = vmatprep.subr.mxu0 %v1124
        %1330 = vmatpush1.msra.mxu0 %v1123
        %1331 = vmatprep.subr.mxu0 %v1126
        %1332 = vmatpush1.msra.mxu0 %v1125
        %1333 = vmatprep.subr.mxu0 %v1128
        %1334 = vmatpush1.msra.mxu0 %v1127
        %1335 = vmatprep.subr.mxu0 %v1130
        %1336 = vmatpush1.msra.mxu0 %v1129
        %1337 = vmatprep.subr.mxu0 %v1132
        %1338 = vmatpush1.msra.mxu0 %v1131
        %1339 = vmatprep.subr.mxu0 %v1134
        %1340 = vmatpush1.msra.mxu0 %v1133
        %1341 = vmatprep.subr.mxu0 %v1136
        %1342 = vmatpush1.msra.mxu0 %v1135
        %1343 = vmatprep.subr.mxu0 %v1138
        %1344 = vmatpush1.msra.mxu0 %v1137
        %1345 = vmatprep.subr.mxu0 %v1140
        %1346 = vmatpush1.msra.mxu0 %v1139
        %1347 = vmatprep.subr.mxu0 %v1142
        %1348 = vmatpush1.msra.mxu0 %v1141
        %1349 = vmatprep.subr.mxu0 %v1144
        %1350 = vmatpush1.msra.mxu0 %v1143
        %1351 = vmatprep.subr.mxu0 %v1146
        %1352 = vmatpush1.msra.mxu0 %v1145
        %1353 = vmatprep.subr.mxu0 %v1148
        %1354 = vmatpush1.msra.mxu0 %v1147
        %1355 = vmatprep.subr.mxu0 %v1150
        %1356 = vmatpush1.msra.mxu0 %v1149
        %1357 = vmatprep.subr.mxu0 %v1152
        %1358 = vmatpush1.msra.mxu0 %v1151
        %1359 = vmatprep.subr.mxu0 %v1154
        %1360 = vmatpush1.msra.mxu0 %v1153
        %1361 = vmatprep.subr.mxu0 %v1156
        %1362 = vmatpush1.msra.mxu0 %v1155
        %1363 = vmatprep.subr.mxu0 %v1158
        %1364 = vmatpush1.msra.mxu0 %v1157
        %1365 = vmatprep.subr.mxu0 %v1160
        %1366 = vmatpush1.msra.mxu0 %v1159
        %1367 = vmatprep.mubr.f32.mxu0 %v1093
        %1368 = vmatmul.mubr.f32.gmra.mrb[0].mxu0 %v1092
        %v1369 = vpop.f32.mrb[0].mxu0
        %v1370 = vadd.f32 %v1293, %v1369
        %v1371 = vpop.f32.mrb[0].mxu0
        %v1372 = vadd.f32 %v1295, %v1371
        %1373 = vmatprep.mubr.f32.mxu0 %v1095
        %1374 = vmatmul.mubr.f32.gmra.mrb[0].mxu0 %v1094
        %v1375 = vpop.f32.mrb[0].mxu0
        %v1376 = vadd.f32 %v1299, %v1375
        %v1377 = vpop.f32.mrb[0].mxu0
        %v1378 = vadd.f32 %v1301, %v1377
        %1379 = vdwg.mxu0
        %v1380 = vrot.slane %v1080, 1
        %v1381 = vrot.slane %v1081, 1
        %v1382 = vrot.slane %v1082, 1
        %v1383 = vrot.slane %v1083, 1
        %v1384 = vsel %vm887, %v1380, %v1382
        %v1385 = vsel %vm887, %v1381, %v1383
        %v1386 = vsel %vm887, %v1382, %v1380
        %v1387 = vsel %vm887, %v1383, %v1381
        %v1388 = vsel %vm896, 0.0, %v1384
        %v1389 = vsel %vm896, 0.0, %v1385
        %v1390 = vsel %vm897, 0.0, %v1386
        %v1391 = vsel %vm897, 0.0, %v1387
        %s1392 = scalar_lea.vmem [#allocation8], 2560
        %v1393 = vld [vmem:[%s1392] sm:$0xff]
        %v1394 = vld [vmem:[%s1392 + $0x8] sm:$0xff]
        %v1395 = vld [vmem:[%s1392 + $0x10] sm:$0xff]
        %v1396 = vld [vmem:[%s1392 + $0x18] sm:$0xff]
        %v1397 = vld [vmem:[%s1392 + $0x20] sm:$0xff]
        %v1398 = vld [vmem:[%s1392 + $0x28] sm:$0xff]
        %v1399 = vld [vmem:[%s1392 + $0x30] sm:$0xff]
        %v1400 = vld [vmem:[%s1392 + $0x38] sm:$0xff]
        %v1401 = vld [vmem:[%s1392 + $0x40] sm:$0xff]
        %v1402 = vld [vmem:[%s1392 + $0x48] sm:$0xff]
        %v1403 = vld [vmem:[%s1392 + $0x50] sm:$0xff]
        %v1404 = vld [vmem:[%s1392 + $0x58] sm:$0xff]
        %v1405 = vld [vmem:[%s1392 + $0x60] sm:$0xff]
        %v1406 = vld [vmem:[%s1392 + $0x68] sm:$0xff]
        %v1407 = vld [vmem:[%s1392 + $0x70] sm:$0xff]
        %v1408 = vld [vmem:[%s1392 + $0x78] sm:$0xff]
        %v1409 = vld [vmem:[%s1392 + $0x80] sm:$0xff]
        %v1410 = vld [vmem:[%s1392 + $0x88] sm:$0xff]
        %v1411 = vld [vmem:[%s1392 + $0x90] sm:$0xff]
        %v1412 = vld [vmem:[%s1392 + $0x98] sm:$0xff]
        %v1413 = vld [vmem:[%s1392 + $0xa0] sm:$0xff]
        %v1414 = vld [vmem:[%s1392 + $0xa8] sm:$0xff]
        %v1415 = vld [vmem:[%s1392 + $0xb0] sm:$0xff]
        %v1416 = vld [vmem:[%s1392 + $0xb8] sm:$0xff]
        %v1417 = vld [vmem:[%s1392 + $0xc0] sm:$0xff]
        %v1418 = vld [vmem:[%s1392 + $0xc8] sm:$0xff]
        %v1419 = vld [vmem:[%s1392 + $0xd0] sm:$0xff]
        %v1420 = vld [vmem:[%s1392 + $0xd8] sm:$0xff]
        %v1421 = vld [vmem:[%s1392 + $0xe0] sm:$0xff]
        %v1422 = vld [vmem:[%s1392 + $0xe8] sm:$0xff]
        %v1423 = vld [vmem:[%s1392 + $0xf0] sm:$0xff]
        %v1424 = vld [vmem:[%s1392 + $0xf8] sm:$0xff]
        %v1425 = vld [vmem:[%s1392 + $0x100] sm:$0xff]
        %v1426 = vld [vmem:[%s1392 + $0x108] sm:$0xff]
        %v1427 = vld [vmem:[%s1392 + $0x110] sm:$0xff]
        %v1428 = vld [vmem:[%s1392 + $0x118] sm:$0xff]
        %v1429 = vld [vmem:[%s1392 + $0x120] sm:$0xff]
        %v1430 = vld [vmem:[%s1392 + $0x128] sm:$0xff]
        %v1431 = vld [vmem:[%s1392 + $0x130] sm:$0xff]
        %v1432 = vld [vmem:[%s1392 + $0x138] sm:$0xff]
        %v1433 = vld [vmem:[%s1392 + $0x140] sm:$0xff]
        %v1434 = vld [vmem:[%s1392 + $0x148] sm:$0xff]
        %v1435 = vld [vmem:[%s1392 + $0x150] sm:$0xff]
        %v1436 = vld [vmem:[%s1392 + $0x158] sm:$0xff]
        %v1437 = vld [vmem:[%s1392 + $0x160] sm:$0xff]
        %v1438 = vld [vmem:[%s1392 + $0x168] sm:$0xff]
        %v1439 = vld [vmem:[%s1392 + $0x170] sm:$0xff]
        %v1440 = vld [vmem:[%s1392 + $0x178] sm:$0xff]
        %v1441 = vld [vmem:[%s1392 + $0x180] sm:$0xff]
        %v1442 = vld [vmem:[%s1392 + $0x188] sm:$0xff]
        %v1443 = vld [vmem:[%s1392 + $0x190] sm:$0xff]
        %v1444 = vld [vmem:[%s1392 + $0x198] sm:$0xff]
        %v1445 = vld [vmem:[%s1392 + $0x1a0] sm:$0xff]
        %v1446 = vld [vmem:[%s1392 + $0x1a8] sm:$0xff]
        %v1447 = vld [vmem:[%s1392 + $0x1b0] sm:$0xff]
        %v1448 = vld [vmem:[%s1392 + $0x1b8] sm:$0xff]
        %v1449 = vld [vmem:[%s1392 + $0x1c0] sm:$0xff]
        %v1450 = vld [vmem:[%s1392 + $0x1c8] sm:$0xff]
        %v1451 = vld [vmem:[%s1392 + $0x1d0] sm:$0xff]
        %v1452 = vld [vmem:[%s1392 + $0x1d8] sm:$0xff]
        %v1453 = vld [vmem:[%s1392 + $0x1e0] sm:$0xff]
        %v1454 = vld [vmem:[%s1392 + $0x1e8] sm:$0xff]
        %v1455 = vld [vmem:[%s1392 + $0x1f0] sm:$0xff]
        %v1456 = vld [vmem:[%s1392 + $0x1f8] sm:$0xff]
        %1457 = vmatprep.subr.mxu0 %v1394
        %1458 = vmatpush1.msra.mxu0 %v1393
        %1459 = vmatprep.subr.mxu0 %v1396
        %1460 = vmatpush1.msra.mxu0 %v1395
        %1461 = vmatprep.subr.mxu0 %v1398
        %1462 = vmatpush1.msra.mxu0 %v1397
        %1463 = vmatprep.subr.mxu0 %v1400
        %1464 = vmatpush1.msra.mxu0 %v1399
        %1465 = vmatprep.subr.mxu0 %v1402
        %1466 = vmatpush1.msra.mxu0 %v1401
        %1467 = vmatprep.subr.mxu0 %v1404
        %1468 = vmatpush1.msra.mxu0 %v1403
        %1469 = vmatprep.subr.mxu0 %v1406
        %1470 = vmatpush1.msra.mxu0 %v1405
        %1471 = vmatprep.subr.mxu0 %v1408
        %1472 = vmatpush1.msra.mxu0 %v1407
        %1473 = vmatprep.subr.mxu0 %v1410
        %1474 = vmatpush1.msra.mxu0 %v1409
        %1475 = vmatprep.subr.mxu0 %v1412
        %1476 = vmatpush1.msra.mxu0 %v1411
        %1477 = vmatprep.subr.mxu0 %v1414
        %1478 = vmatpush1.msra.mxu0 %v1413
        %1479 = vmatprep.subr.mxu0 %v1416
        %1480 = vmatpush1.msra.mxu0 %v1415
        %1481 = vmatprep.subr.mxu0 %v1418
        %1482 = vmatpush1.msra.mxu0 %v1417
        %1483 = vmatprep.subr.mxu0 %v1420
        %1484 = vmatpush1.msra.mxu0 %v1419
        %1485 = vmatprep.subr.mxu0 %v1422
        %1486 = vmatpush1.msra.mxu0 %v1421
        %1487 = vmatprep.subr.mxu0 %v1424
        %1488 = vmatpush1.msra.mxu0 %v1423
        %1489 = vmatprep.subr.mxu0 %v1426
        %1490 = vmatpush1.msra.mxu0 %v1425
        %1491 = vmatprep.subr.mxu0 %v1428
        %1492 = vmatpush1.msra.mxu0 %v1427
        %1493 = vmatprep.subr.mxu0 %v1430
        %1494 = vmatpush1.msra.mxu0 %v1429
        %1495 = vmatprep.subr.mxu0 %v1432
        %1496 = vmatpush1.msra.mxu0 %v1431
        %1497 = vmatprep.subr.mxu0 %v1434
        %1498 = vmatpush1.msra.mxu0 %v1433
        %1499 = vmatprep.subr.mxu0 %v1436
        %1500 = vmatpush1.msra.mxu0 %v1435
        %1501 = vmatprep.subr.mxu0 %v1438
        %1502 = vmatpush1.msra.mxu0 %v1437
        %1503 = vmatprep.subr.mxu0 %v1440
        %1504 = vmatpush1.msra.mxu0 %v1439
        %1505 = vmatprep.subr.mxu0 %v1442
        %1506 = vmatpush1.msra.mxu0 %v1441
        %1507 = vmatprep.subr.mxu0 %v1444
        %1508 = vmatpush1.msra.mxu0 %v1443
        %1509 = vmatprep.subr.mxu0 %v1446
        %1510 = vmatpush1.msra.mxu0 %v1445
        %1511 = vmatprep.subr.mxu0 %v1448
        %1512 = vmatpush1.msra.mxu0 %v1447
        %1513 = vmatprep.subr.mxu0 %v1450
        %1514 = vmatpush1.msra.mxu0 %v1449
        %1515 = vmatprep.subr.mxu0 %v1452
        %1516 = vmatpush1.msra.mxu0 %v1451
        %1517 = vmatprep.subr.mxu0 %v1454
        %1518 = vmatpush1.msra.mxu0 %v1453
        %1519 = vmatprep.subr.mxu0 %v1456
        %1520 = vmatpush1.msra.mxu0 %v1455
        %1521 = vmatprep.mubr.f32.mxu0 %v1389
        %1522 = vmatmul.mubr.f32.gmra.mrb[0].mxu0 %v1388
        %v1523 = vpop.f32.mrb[0].mxu0
        %v1524 = vadd.f32 0.0, %v1523
        %v1525 = vpop.f32.mrb[0].mxu0
        %v1526 = vadd.f32 0.0, %v1525
        %1527 = vmatprep.mubr.f32.mxu0 %v1391
        %1528 = vmatmul.mubr.f32.gmra.mrb[0].mxu0 %v1390
        %v1529 = vpop.f32.mrb[0].mxu0
        %v1530 = vadd.f32 0.0, %v1529
        %v1531 = vpop.f32.mrb[0].mxu0
        %v1532 = vadd.f32 0.0, %v1531
        %1533 = vdwg.mxu0
        %v1534 = vadd.f32 %v1370, %v1524
        %v1535 = vadd.f32 %v1372, %v1526
        %v1536 = vadd.f32 %v1376, %v1530
        %v1537 = vadd.f32 %v1378, %v1532
        %s1538 = scalar_lea.vmem [#allocation10], 2
        %v1539 = vld [vmem:[%s1538] sm:$0x3]
        %v1541 = vlaneseq
        %v1542 = vshrl.u32 %v1541, 7
        %v1543 = vsub.s32 0, %v1542
        %v1544 = vrot.slane %v1539, %v1543
        %v1545 = vlaneseq
        %v1546 = vshrl.u32 %v1545, 7
        %v1547 = vsub.s32 1, %v1546
        %v1548 = vrot.slane %v1539, %v1547
        %v1551 = vmul.f32 %v1534, %v1544
        %v1552 = vmul.f32 %v1535, %v1548
        %v1553 = vmul.f32 %v1536, %v1544
        %v1554 = vmul.f32 %v1537, %v1548
        %s1555 = scalar_lea.vmem [#allocation11], 2
        %v1556 = vld [vmem:[%s1555] sm:$0x3]
        %v1558 = vlaneseq
        %v1559 = vshrl.u32 %v1558, 7
        %v1560 = vsub.s32 0, %v1559
        %v1561 = vrot.slane %v1556, %v1560
        %v1562 = vlaneseq
        %v1563 = vshrl.u32 %v1562, 7
        %v1564 = vsub.s32 1, %v1563
        %v1565 = vrot.slane %v1556, %v1564
        %v1568 = vadd.f32 %v1551, %v1561
        %v1569 = vadd.f32 %v1552, %v1565
        %v1570 = vadd.f32 %v1553, %v1561
        %v1571 = vadd.f32 %v1554, %v1565
        %v1572 = vmax.f32 %v1568, 0.0
        %v1573 = vmax.f32 %v1569, 0.0
        %v1574 = vmax.f32 %v1570, 0.0
        %v1575 = vmax.f32 %v1571, 0.0
        %v1576 = vrot.slane %v1572, 7
        %v1577 = vrot.slane %v1573, 7
        %v1578 = vrot.slane %v1574, 7
        %v1579 = vrot.slane %v1575, 7
        %v1580 = vsel %vm586, %v1576, %v1578
        %v1581 = vsel %vm586, %v1577, %v1579
        %v1582 = vsel %vm586, %v1578, %v1576
        %v1583 = vsel %vm586, %v1579, %v1577
        %v1584 = vsel %vm594, 0.0, %v1582
        %v1585 = vsel %vm594, 0.0, %v1583
        %v1586 = vsel %vm595, 0.0, %v1580
        %v1587 = vsel %vm595, 0.0, %v1581
        %s1588 = scalar_lea.vmem [#allocation8], 3072
        %v1589 = vld [vmem:[%s1588] sm:$0xff]
        %v1590 = vld [vmem:[%s1588 + $0x8] sm:$0xff]
        %v1591 = vld [vmem:[%s1588 + $0x10] sm:$0xff]
        %v1592 = vld [vmem:[%s1588 + $0x18] sm:$0xff]
        %v1593 = vld [vmem:[%s1588 + $0x20] sm:$0xff]
        %v1594 = vld [vmem:[%s1588 + $0x28] sm:$0xff]
        %v1595 = vld [vmem:[%s1588 + $0x30] sm:$0xff]
        %v1596 = vld [vmem:[%s1588 + $0x38] sm:$0xff]
        %v1597 = vld [vmem:[%s1588 + $0x40] sm:$0xff]
        %v1598 = vld [vmem:[%s1588 + $0x48] sm:$0xff]
        %v1599 = vld [vmem:[%s1588 + $0x50] sm:$0xff]
        %v1600 = vld [vmem:[%s1588 + $0x58] sm:$0xff]
        %v1601 = vld [vmem:[%s1588 + $0x60] sm:$0xff]
        %v1602 = vld [vmem:[%s1588 + $0x68] sm:$0xff]
        %v1603 = vld [vmem:[%s1588 + $0x70] sm:$0xff]
        %v1604 = vld [vmem:[%s1588 + $0x78] sm:$0xff]
        %v1605 = vld [vmem:[%s1588 + $0x80] sm:$0xff]
        %v1606 = vld [vmem:[%s1588 + $0x88] sm:$0xff]
        %v1607 = vld [vmem:[%s1588 + $0x90] sm:$0xff]
        %v1608 = vld [vmem:[%s1588 + $0x98] sm:$0xff]
        %v1609 = vld [vmem:[%s1588 + $0xa0] sm:$0xff]
        %v1610 = vld [vmem:[%s1588 + $0xa8] sm:$0xff]
        %v1611 = vld [vmem:[%s1588 + $0xb0] sm:$0xff]
        %v1612 = vld [vmem:[%s1588 + $0xb8] sm:$0xff]
        %v1613 = vld [vmem:[%s1588 + $0xc0] sm:$0xff]
        %v1614 = vld [vmem:[%s1588 + $0xc8] sm:$0xff]
        %v1615 = vld [vmem:[%s1588 + $0xd0] sm:$0xff]
        %v1616 = vld [vmem:[%s1588 + $0xd8] sm:$0xff]
        %v1617 = vld [vmem:[%s1588 + $0xe0] sm:$0xff]
        %v1618 = vld [vmem:[%s1588 + $0xe8] sm:$0xff]
        %v1619 = vld [vmem:[%s1588 + $0xf0] sm:$0xff]
        %v1620 = vld [vmem:[%s1588 + $0xf8] sm:$0xff]
        %v1621 = vld [vmem:[%s1588 + $0x100] sm:$0xff]
        %v1622 = vld [vmem:[%s1588 + $0x108] sm:$0xff]
        %v1623 = vld [vmem:[%s1588 + $0x110] sm:$0xff]
        %v1624 = vld [vmem:[%s1588 + $0x118] sm:$0xff]
        %v1625 = vld [vmem:[%s1588 + $0x120] sm:$0xff]
        %v1626 = vld [vmem:[%s1588 + $0x128] sm:$0xff]
        %v1627 = vld [vmem:[%s1588 + $0x130] sm:$0xff]
        %v1628 = vld [vmem:[%s1588 + $0x138] sm:$0xff]
        %v1629 = vld [vmem:[%s1588 + $0x140] sm:$0xff]
        %v1630 = vld [vmem:[%s1588 + $0x148] sm:$0xff]
        %v1631 = vld [vmem:[%s1588 + $0x150] sm:$0xff]
        %v1632 = vld [vmem:[%s1588 + $0x158] sm:$0xff]
        %v1633 = vld [vmem:[%s1588 + $0x160] sm:$0xff]
        %v1634 = vld [vmem:[%s1588 + $0x168] sm:$0xff]
        %v1635 = vld [vmem:[%s1588 + $0x170] sm:$0xff]
        %v1636 = vld [vmem:[%s1588 + $0x178] sm:$0xff]
        %v1637 = vld [vmem:[%s1588 + $0x180] sm:$0xff]
        %v1638 = vld [vmem:[%s1588 + $0x188] sm:$0xff]
        %v1639 = vld [vmem:[%s1588 + $0x190] sm:$0xff]
        %v1640 = vld [vmem:[%s1588 + $0x198] sm:$0xff]
        %v1641 = vld [vmem:[%s1588 + $0x1a0] sm:$0xff]
        %v1642 = vld [vmem:[%s1588 + $0x1a8] sm:$0xff]
        %v1643 = vld [vmem:[%s1588 + $0x1b0] sm:$0xff]
        %v1644 = vld [vmem:[%s1588 + $0x1b8] sm:$0xff]
        %v1645 = vld [vmem:[%s1588 + $0x1c0] sm:$0xff]
        %v1646 = vld [vmem:[%s1588 + $0x1c8] sm:$0xff]
        %v1647 = vld [vmem:[%s1588 + $0x1d0] sm:$0xff]
        %v1648 = vld [vmem:[%s1588 + $0x1d8] sm:$0xff]
        %v1649 = vld [vmem:[%s1588 + $0x1e0] sm:$0xff]
        %v1650 = vld [vmem:[%s1588 + $0x1e8] sm:$0xff]
        %v1651 = vld [vmem:[%s1588 + $0x1f0] sm:$0xff]
        %v1652 = vld [vmem:[%s1588 + $0x1f8] sm:$0xff]
        %s1653 = scalar_lea.vmem [#allocation8], 3584
        %v1654 = vld [vmem:[%s1653] sm:$0xff]
        %v1655 = vld [vmem:[%s1653 + $0x8] sm:$0xff]
        %v1656 = vld [vmem:[%s1653 + $0x10] sm:$0xff]
        %v1657 = vld [vmem:[%s1653 + $0x18] sm:$0xff]
        %v1658 = vld [vmem:[%s1653 + $0x20] sm:$0xff]
        %v1659 = vld [vmem:[%s1653 + $0x28] sm:$0xff]
        %v1660 = vld [vmem:[%s1653 + $0x30] sm:$0xff]
        %v1661 = vld [vmem:[%s1653 + $0x38] sm:$0xff]
        %v1662 = vld [vmem:[%s1653 + $0x40] sm:$0xff]
        %v1663 = vld [vmem:[%s1653 + $0x48] sm:$0xff]
        %v1664 = vld [vmem:[%s1653 + $0x50] sm:$0xff]
        %v1665 = vld [vmem:[%s1653 + $0x58] sm:$0xff]
        %v1666 = vld [vmem:[%s1653 + $0x60] sm:$0xff]
        %v1667 = vld [vmem:[%s1653 + $0x68] sm:$0xff]
        %v1668 = vld [vmem:[%s1653 + $0x70] sm:$0xff]
        %v1669 = vld [vmem:[%s1653 + $0x78] sm:$0xff]
        %v1670 = vld [vmem:[%s1653 + $0x80] sm:$0xff]
        %v1671 = vld [vmem:[%s1653 + $0x88] sm:$0xff]
        %v1672 = vld [vmem:[%s1653 + $0x90] sm:$0xff]
        %v1673 = vld [vmem:[%s1653 + $0x98] sm:$0xff]
        %v1674 = vld [vmem:[%s1653 + $0xa0] sm:$0xff]
        %v1675 = vld [vmem:[%s1653 + $0xa8] sm:$0xff]
        %v1676 = vld [vmem:[%s1653 + $0xb0] sm:$0xff]
        %v1677 = vld [vmem:[%s1653 + $0xb8] sm:$0xff]
        %v1678 = vld [vmem:[%s1653 + $0xc0] sm:$0xff]
        %v1679 = vld [vmem:[%s1653 + $0xc8] sm:$0xff]
        %v1680 = vld [vmem:[%s1653 + $0xd0] sm:$0xff]
        %v1681 = vld [vmem:[%s1653 + $0xd8] sm:$0xff]
        %v1682 = vld [vmem:[%s1653 + $0xe0] sm:$0xff]
        %v1683 = vld [vmem:[%s1653 + $0xe8] sm:$0xff]
        %v1684 = vld [vmem:[%s1653 + $0xf0] sm:$0xff]
        %v1685 = vld [vmem:[%s1653 + $0xf8] sm:$0xff]
        %v1686 = vld [vmem:[%s1653 + $0x100] sm:$0xff]
        %v1687 = vld [vmem:[%s1653 + $0x108] sm:$0xff]
        %v1688 = vld [vmem:[%s1653 + $0x110] sm:$0xff]
        %v1689 = vld [vmem:[%s1653 + $0x118] sm:$0xff]
        %v1690 = vld [vmem:[%s1653 + $0x120] sm:$0xff]
        %v1691 = vld [vmem:[%s1653 + $0x128] sm:$0xff]
        %v1692 = vld [vmem:[%s1653 + $0x130] sm:$0xff]
        %v1693 = vld [vmem:[%s1653 + $0x138] sm:$0xff]
        %v1694 = vld [vmem:[%s1653 + $0x140] sm:$0xff]
        %v1695 = vld [vmem:[%s1653 + $0x148] sm:$0xff]
        %v1696 = vld [vmem:[%s1653 + $0x150] sm:$0xff]
        %v1697 = vld [vmem:[%s1653 + $0x158] sm:$0xff]
        %v1698 = vld [vmem:[%s1653 + $0x160] sm:$0xff]
        %v1699 = vld [vmem:[%s1653 + $0x168] sm:$0xff]
        %v1700 = vld [vmem:[%s1653 + $0x170] sm:$0xff]
        %v1701 = vld [vmem:[%s1653 + $0x178] sm:$0xff]
        %v1702 = vld [vmem:[%s1653 + $0x180] sm:$0xff]
        %v1703 = vld [vmem:[%s1653 + $0x188] sm:$0xff]
        %v1704 = vld [vmem:[%s1653 + $0x190] sm:$0xff]
        %v1705 = vld [vmem:[%s1653 + $0x198] sm:$0xff]
        %v1706 = vld [vmem:[%s1653 + $0x1a0] sm:$0xff]
        %v1707 = vld [vmem:[%s1653 + $0x1a8] sm:$0xff]
        %v1708 = vld [vmem:[%s1653 + $0x1b0] sm:$0xff]
        %v1709 = vld [vmem:[%s1653 + $0x1b8] sm:$0xff]
        %v1710 = vld [vmem:[%s1653 + $0x1c0] sm:$0xff]
        %v1711 = vld [vmem:[%s1653 + $0x1c8] sm:$0xff]
        %v1712 = vld [vmem:[%s1653 + $0x1d0] sm:$0xff]
        %v1713 = vld [vmem:[%s1653 + $0x1d8] sm:$0xff]
        %v1714 = vld [vmem:[%s1653 + $0x1e0] sm:$0xff]
        %v1715 = vld [vmem:[%s1653 + $0x1e8] sm:$0xff]
        %v1716 = vld [vmem:[%s1653 + $0x1f0] sm:$0xff]
        %v1717 = vld [vmem:[%s1653 + $0x1f8] sm:$0xff]
        %1718 = vmatprep.subr.mxu0 %v1655
        %1719 = vmatpush1.msra.mxu0 %v1654
        %1720 = vmatprep.subr.mxu0 %v1657
        %1721 = vmatpush1.msra.mxu0 %v1656
        %1722 = vmatprep.subr.mxu0 %v1659
        %1723 = vmatpush1.msra.mxu0 %v1658
        %1724 = vmatprep.subr.mxu0 %v1661
        %1725 = vmatpush1.msra.mxu0 %v1660
        %1726 = vmatprep.subr.mxu0 %v1663
        %1727 = vmatpush1.msra.mxu0 %v1662
        %1728 = vmatprep.subr.mxu0 %v1665
        %1729 = vmatpush1.msra.mxu0 %v1664
        %1730 = vmatprep.subr.mxu0 %v1667
        %1731 = vmatpush1.msra.mxu0 %v1666
        %1732 = vmatprep.subr.mxu0 %v1669
        %1733 = vmatpush1.msra.mxu0 %v1668
        %1734 = vmatprep.subr.mxu0 %v1671
        %1735 = vmatpush1.msra.mxu0 %v1670
        %1736 = vmatprep.subr.mxu0 %v1673
        %1737 = vmatpush1.msra.mxu0 %v1672
        %1738 = vmatprep.subr.mxu0 %v1675
        %1739 = vmatpush1.msra.mxu0 %v1674
        %1740 = vmatprep.subr.mxu0 %v1677
        %1741 = vmatpush1.msra.mxu0 %v1676
        %1742 = vmatprep.subr.mxu0 %v1679
        %1743 = vmatpush1.msra.mxu0 %v1678
        %1744 = vmatprep.subr.mxu0 %v1681
        %1745 = vmatpush1.msra.mxu0 %v1680
        %1746 = vmatprep.subr.mxu0 %v1683
        %1747 = vmatpush1.msra.mxu0 %v1682
        %1748 = vmatprep.subr.mxu0 %v1685
        %1749 = vmatpush1.msra.mxu0 %v1684
        %1750 = vmatprep.subr.mxu0 %v1687
        %1751 = vmatpush1.msra.mxu0 %v1686
        %1752 = vmatprep.subr.mxu0 %v1689
        %1753 = vmatpush1.msra.mxu0 %v1688
        %1754 = vmatprep.subr.mxu0 %v1691
        %1755 = vmatpush1.msra.mxu0 %v1690
        %1756 = vmatprep.subr.mxu0 %v1693
        %1757 = vmatpush1.msra.mxu0 %v1692
        %1758 = vmatprep.subr.mxu0 %v1695
        %1759 = vmatpush1.msra.mxu0 %v1694
        %1760 = vmatprep.subr.mxu0 %v1697
        %1761 = vmatpush1.msra.mxu0 %v1696
        %1762 = vmatprep.subr.mxu0 %v1699
        %1763 = vmatpush1.msra.mxu0 %v1698
        %1764 = vmatprep.subr.mxu0 %v1701
        %1765 = vmatpush1.msra.mxu0 %v1700
        %1766 = vmatprep.subr.mxu0 %v1703
        %1767 = vmatpush1.msra.mxu0 %v1702
        %1768 = vmatprep.subr.mxu0 %v1705
        %1769 = vmatpush1.msra.mxu0 %v1704
        %1770 = vmatprep.subr.mxu0 %v1707
        %1771 = vmatpush1.msra.mxu0 %v1706
        %1772 = vmatprep.subr.mxu0 %v1709
        %1773 = vmatpush1.msra.mxu0 %v1708
        %1774 = vmatprep.subr.mxu0 %v1711
        %1775 = vmatpush1.msra.mxu0 %v1710
        %1776 = vmatprep.subr.mxu0 %v1713
        %1777 = vmatpush1.msra.mxu0 %v1712
        %1778 = vmatprep.subr.mxu0 %v1715
        %1779 = vmatpush1.msra.mxu0 %v1714
        %1780 = vmatprep.subr.mxu0 %v1717
        %1781 = vmatpush1.msra.mxu0 %v1716
        %1782 = vmatprep.mubr.f32.mxu0 %v1573
        %1783 = vmatmul.mubr.f32.gmra.mrb[0].mxu0 %v1572
        %v1784 = vpop.f32.mrb[0].mxu0
        %v1785 = vadd.f32 0.0, %v1784
        %v1786 = vpop.f32.mrb[0].mxu0
        %v1787 = vadd.f32 0.0, %v1786
        %1788 = vmatprep.mubr.f32.mxu0 %v1575
        %1789 = vmatmul.mubr.f32.gmra.mrb[0].mxu0 %v1574
        %v1790 = vpop.f32.mrb[0].mxu0
        %v1791 = vadd.f32 0.0, %v1790
        %v1792 = vpop.f32.mrb[0].mxu0
        %v1793 = vadd.f32 0.0, %v1792
        %1794 = vdwg.mxu0
        %1795 = vmatprep.subr.mxu0 %v1590
        %1796 = vmatpush1.msra.mxu0 %v1589
        %1797 = vmatprep.subr.mxu0 %v1592
        %1798 = vmatpush1.msra.mxu0 %v1591
        %1799 = vmatprep.subr.mxu0 %v1594
        %1800 = vmatpush1.msra.mxu0 %v1593
        %1801 = vmatprep.subr.mxu0 %v1596
        %1802 = vmatpush1.msra.mxu0 %v1595
        %1803 = vmatprep.subr.mxu0 %v1598
        %1804 = vmatpush1.msra.mxu0 %v1597
        %1805 = vmatprep.subr.mxu0 %v1600
        %1806 = vmatpush1.msra.mxu0 %v1599
        %1807 = vmatprep.subr.mxu0 %v1602
        %1808 = vmatpush1.msra.mxu0 %v1601
        %1809 = vmatprep.subr.mxu0 %v1604
        %1810 = vmatpush1.msra.mxu0 %v1603
        %1811 = vmatprep.subr.mxu0 %v1606
        %1812 = vmatpush1.msra.mxu0 %v1605
        %1813 = vmatprep.subr.mxu0 %v1608
        %1814 = vmatpush1.msra.mxu0 %v1607
        %1815 = vmatprep.subr.mxu0 %v1610
        %1816 = vmatpush1.msra.mxu0 %v1609
        %1817 = vmatprep.subr.mxu0 %v1612
        %1818 = vmatpush1.msra.mxu0 %v1611
        %1819 = vmatprep.subr.mxu0 %v1614
        %1820 = vmatpush1.msra.mxu0 %v1613
        %1821 = vmatprep.subr.mxu0 %v1616
        %1822 = vmatpush1.msra.mxu0 %v1615
        %1823 = vmatprep.subr.mxu0 %v1618
        %1824 = vmatpush1.msra.mxu0 %v1617
        %1825 = vmatprep.subr.mxu0 %v1620
        %1826 = vmatpush1.msra.mxu0 %v1619
        %1827 = vmatprep.subr.mxu0 %v1622
        %1828 = vmatpush1.msra.mxu0 %v1621
        %1829 = vmatprep.subr.mxu0 %v1624
        %1830 = vmatpush1.msra.mxu0 %v1623
        %1831 = vmatprep.subr.mxu0 %v1626
        %1832 = vmatpush1.msra.mxu0 %v1625
        %1833 = vmatprep.subr.mxu0 %v1628
        %1834 = vmatpush1.msra.mxu0 %v1627
        %1835 = vmatprep.subr.mxu0 %v1630
        %1836 = vmatpush1.msra.mxu0 %v1629
        %1837 = vmatprep.subr.mxu0 %v1632
        %1838 = vmatpush1.msra.mxu0 %v1631
        %1839 = vmatprep.subr.mxu0 %v1634
        %1840 = vmatpush1.msra.mxu0 %v1633
        %1841 = vmatprep.subr.mxu0 %v1636
        %1842 = vmatpush1.msra.mxu0 %v1635
        %1843 = vmatprep.subr.mxu0 %v1638
        %1844 = vmatpush1.msra.mxu0 %v1637
        %1845 = vmatprep.subr.mxu0 %v1640
        %1846 = vmatpush1.msra.mxu0 %v1639
        %1847 = vmatprep.subr.mxu0 %v1642
        %1848 = vmatpush1.msra.mxu0 %v1641
        %1849 = vmatprep.subr.mxu0 %v1644
        %1850 = vmatpush1.msra.mxu0 %v1643
        %1851 = vmatprep.subr.mxu0 %v1646
        %1852 = vmatpush1.msra.mxu0 %v1645
        %1853 = vmatprep.subr.mxu0 %v1648
        %1854 = vmatpush1.msra.mxu0 %v1647
        %1855 = vmatprep.subr.mxu0 %v1650
        %1856 = vmatpush1.msra.mxu0 %v1649
        %1857 = vmatprep.subr.mxu0 %v1652
        %1858 = vmatpush1.msra.mxu0 %v1651
        %1859 = vmatprep.mubr.f32.mxu0 %v1585
        %1860 = vmatmul.mubr.f32.gmra.mrb[0].mxu0 %v1584
        %v1861 = vpop.f32.mrb[0].mxu0
        %v1862 = vadd.f32 %v1785, %v1861
        %v1863 = vpop.f32.mrb[0].mxu0
        %v1864 = vadd.f32 %v1787, %v1863
        %1865 = vmatprep.mubr.f32.mxu0 %v1587
        %1866 = vmatmul.mubr.f32.gmra.mrb[0].mxu0 %v1586
        %v1867 = vpop.f32.mrb[0].mxu0
        %v1868 = vadd.f32 %v1791, %v1867
        %v1869 = vpop.f32.mrb[0].mxu0
        %v1870 = vadd.f32 %v1793, %v1869
        %1871 = vdwg.mxu0
        %v1872 = vrot.slane %v1572, 1
        %v1873 = vrot.slane %v1573, 1
        %v1874 = vrot.slane %v1574, 1
        %v1875 = vrot.slane %v1575, 1
        %v1876 = vsel %vm887, %v1872, %v1874
        %v1877 = vsel %vm887, %v1873, %v1875
        %v1878 = vsel %vm887, %v1874, %v1872
        %v1879 = vsel %vm887, %v1875, %v1873
        %v1880 = vsel %vm896, 0.0, %v1876
        %v1881 = vsel %vm896, 0.0, %v1877
        %v1882 = vsel %vm897, 0.0, %v1878
        %v1883 = vsel %vm897, 0.0, %v1879
        %s1884 = scalar_lea.vmem [#allocation8], 4096
        %v1885 = vld [vmem:[%s1884] sm:$0xff]
        %v1886 = vld [vmem:[%s1884 + $0x8] sm:$0xff]
        %v1887 = vld [vmem:[%s1884 + $0x10] sm:$0xff]
        %v1888 = vld [vmem:[%s1884 + $0x18] sm:$0xff]
        %v1889 = vld [vmem:[%s1884 + $0x20] sm:$0xff]
        %v1890 = vld [vmem:[%s1884 + $0x28] sm:$0xff]
        %v1891 = vld [vmem:[%s1884 + $0x30] sm:$0xff]
        %v1892 = vld [vmem:[%s1884 + $0x38] sm:$0xff]
        %v1893 = vld [vmem:[%s1884 + $0x40] sm:$0xff]
        %v1894 = vld [vmem:[%s1884 + $0x48] sm:$0xff]
        %v1895 = vld [vmem:[%s1884 + $0x50] sm:$0xff]
        %v1896 = vld [vmem:[%s1884 + $0x58] sm:$0xff]
        %v1897 = vld [vmem:[%s1884 + $0x60] sm:$0xff]
        %v1898 = vld [vmem:[%s1884 + $0x68] sm:$0xff]
        %v1899 = vld [vmem:[%s1884 + $0x70] sm:$0xff]
        %v1900 = vld [vmem:[%s1884 + $0x78] sm:$0xff]
        %v1901 = vld [vmem:[%s1884 + $0x80] sm:$0xff]
        %v1902 = vld [vmem:[%s1884 + $0x88] sm:$0xff]
        %v1903 = vld [vmem:[%s1884 + $0x90] sm:$0xff]
        %v1904 = vld [vmem:[%s1884 + $0x98] sm:$0xff]
        %v1905 = vld [vmem:[%s1884 + $0xa0] sm:$0xff]
        %v1906 = vld [vmem:[%s1884 + $0xa8] sm:$0xff]
        %v1907 = vld [vmem:[%s1884 + $0xb0] sm:$0xff]
        %v1908 = vld [vmem:[%s1884 + $0xb8] sm:$0xff]
        %v1909 = vld [vmem:[%s1884 + $0xc0] sm:$0xff]
        %v1910 = vld [vmem:[%s1884 + $0xc8] sm:$0xff]
        %v1911 = vld [vmem:[%s1884 + $0xd0] sm:$0xff]
        %v1912 = vld [vmem:[%s1884 + $0xd8] sm:$0xff]
        %v1913 = vld [vmem:[%s1884 + $0xe0] sm:$0xff]
        %v1914 = vld [vmem:[%s1884 + $0xe8] sm:$0xff]
        %v1915 = vld [vmem:[%s1884 + $0xf0] sm:$0xff]
        %v1916 = vld [vmem:[%s1884 + $0xf8] sm:$0xff]
        %v1917 = vld [vmem:[%s1884 + $0x100] sm:$0xff]
        %v1918 = vld [vmem:[%s1884 + $0x108] sm:$0xff]
        %v1919 = vld [vmem:[%s1884 + $0x110] sm:$0xff]
        %v1920 = vld [vmem:[%s1884 + $0x118] sm:$0xff]
        %v1921 = vld [vmem:[%s1884 + $0x120] sm:$0xff]
        %v1922 = vld [vmem:[%s1884 + $0x128] sm:$0xff]
        %v1923 = vld [vmem:[%s1884 + $0x130] sm:$0xff]
        %v1924 = vld [vmem:[%s1884 + $0x138] sm:$0xff]
        %v1925 = vld [vmem:[%s1884 + $0x140] sm:$0xff]
        %v1926 = vld [vmem:[%s1884 + $0x148] sm:$0xff]
        %v1927 = vld [vmem:[%s1884 + $0x150] sm:$0xff]
        %v1928 = vld [vmem:[%s1884 + $0x158] sm:$0xff]
        %v1929 = vld [vmem:[%s1884 + $0x160] sm:$0xff]
        %v1930 = vld [vmem:[%s1884 + $0x168] sm:$0xff]
        %v1931 = vld [vmem:[%s1884 + $0x170] sm:$0xff]
        %v1932 = vld [vmem:[%s1884 + $0x178] sm:$0xff]
        %v1933 = vld [vmem:[%s1884 + $0x180] sm:$0xff]
        %v1934 = vld [vmem:[%s1884 + $0x188] sm:$0xff]
        %v1935 = vld [vmem:[%s1884 + $0x190] sm:$0xff]
        %v1936 = vld [vmem:[%s1884 + $0x198] sm:$0xff]
        %v1937 = vld [vmem:[%s1884 + $0x1a0] sm:$0xff]
        %v1938 = vld [vmem:[%s1884 + $0x1a8] sm:$0xff]
        %v1939 = vld [vmem:[%s1884 + $0x1b0] sm:$0xff]
        %v1940 = vld [vmem:[%s1884 + $0x1b8] sm:$0xff]
        %v1941 = vld [vmem:[%s1884 + $0x1c0] sm:$0xff]
        %v1942 = vld [vmem:[%s1884 + $0x1c8] sm:$0xff]
        %v1943 = vld [vmem:[%s1884 + $0x1d0] sm:$0xff]
        %v1944 = vld [vmem:[%s1884 + $0x1d8] sm:$0xff]
        %v1945 = vld [vmem:[%s1884 + $0x1e0] sm:$0xff]
        %v1946 = vld [vmem:[%s1884 + $0x1e8] sm:$0xff]
        %v1947 = vld [vmem:[%s1884 + $0x1f0] sm:$0xff]
        %v1948 = vld [vmem:[%s1884 + $0x1f8] sm:$0xff]
        %1949 = vmatprep.subr.mxu0 %v1886
        %1950 = vmatpush1.msra.mxu0 %v1885
        %1951 = vmatprep.subr.mxu0 %v1888
        %1952 = vmatpush1.msra.mxu0 %v1887
        %1953 = vmatprep.subr.mxu0 %v1890
        %1954 = vmatpush1.msra.mxu0 %v1889
        %1955 = vmatprep.subr.mxu0 %v1892
        %1956 = vmatpush1.msra.mxu0 %v1891
        %1957 = vmatprep.subr.mxu0 %v1894
        %1958 = vmatpush1.msra.mxu0 %v1893
        %1959 = vmatprep.subr.mxu0 %v1896
        %1960 = vmatpush1.msra.mxu0 %v1895
        %1961 = vmatprep.subr.mxu0 %v1898
        %1962 = vmatpush1.msra.mxu0 %v1897
        %1963 = vmatprep.subr.mxu0 %v1900
        %1964 = vmatpush1.msra.mxu0 %v1899
        %1965 = vmatprep.subr.mxu0 %v1902
        %1966 = vmatpush1.msra.mxu0 %v1901
        %1967 = vmatprep.subr.mxu0 %v1904
        %1968 = vmatpush1.msra.mxu0 %v1903
        %1969 = vmatprep.subr.mxu0 %v1906
        %1970 = vmatpush1.msra.mxu0 %v1905
        %1971 = vmatprep.subr.mxu0 %v1908
        %1972 = vmatpush1.msra.mxu0 %v1907
        %1973 = vmatprep.subr.mxu0 %v1910
        %1974 = vmatpush1.msra.mxu0 %v1909
        %1975 = vmatprep.subr.mxu0 %v1912
        %1976 = vmatpush1.msra.mxu0 %v1911
        %1977 = vmatprep.subr.mxu0 %v1914
        %1978 = vmatpush1.msra.mxu0 %v1913
        %1979 = vmatprep.subr.mxu0 %v1916
        %1980 = vmatpush1.msra.mxu0 %v1915
        %1981 = vmatprep.subr.mxu0 %v1918
        %1982 = vmatpush1.msra.mxu0 %v1917
        %1983 = vmatprep.subr.mxu0 %v1920
        %1984 = vmatpush1.msra.mxu0 %v1919
        %1985 = vmatprep.subr.mxu0 %v1922
        %1986 = vmatpush1.msra.mxu0 %v1921
        %1987 = vmatprep.subr.mxu0 %v1924
        %1988 = vmatpush1.msra.mxu0 %v1923
        %1989 = vmatprep.subr.mxu0 %v1926
        %1990 = vmatpush1.msra.mxu0 %v1925
        %1991 = vmatprep.subr.mxu0 %v1928
        %1992 = vmatpush1.msra.mxu0 %v1927
        %1993 = vmatprep.subr.mxu0 %v1930
        %1994 = vmatpush1.msra.mxu0 %v1929
        %1995 = vmatprep.subr.mxu0 %v1932
        %1996 = vmatpush1.msra.mxu0 %v1931
        %1997 = vmatprep.subr.mxu0 %v1934
        %1998 = vmatpush1.msra.mxu0 %v1933
        %1999 = vmatprep.subr.mxu0 %v1936
        %2000 = vmatpush1.msra.mxu0 %v1935
        %2001 = vmatprep.subr.mxu0 %v1938
        %2002 = vmatpush1.msra.mxu0 %v1937
        %2003 = vmatprep.subr.mxu0 %v1940
        %2004 = vmatpush1.msra.mxu0 %v1939
        %2005 = vmatprep.subr.mxu0 %v1942
        %2006 = vmatpush1.msra.mxu0 %v1941
        %2007 = vmatprep.subr.mxu0 %v1944
        %2008 = vmatpush1.msra.mxu0 %v1943
        %2009 = vmatprep.subr.mxu0 %v1946
        %2010 = vmatpush1.msra.mxu0 %v1945
        %2011 = vmatprep.subr.mxu0 %v1948
        %2012 = vmatpush1.msra.mxu0 %v1947
        %2013 = vmatprep.mubr.f32.mxu0 %v1881
        %2014 = vmatmul.mubr.f32.gmra.mrb[0].mxu0 %v1880
        %v2015 = vpop.f32.mrb[0].mxu0
        %v2016 = vadd.f32 0.0, %v2015
        %v2017 = vpop.f32.mrb[0].mxu0
        %v2018 = vadd.f32 0.0, %v2017
        %2019 = vmatprep.mubr.f32.mxu0 %v1883
        %2020 = vmatmul.mubr.f32.gmra.mrb[0].mxu0 %v1882
        %v2021 = vpop.f32.mrb[0].mxu0
        %v2022 = vadd.f32 0.0, %v2021
        %v2023 = vpop.f32.mrb[0].mxu0
        %v2024 = vadd.f32 0.0, %v2023
        %2025 = vdwg.mxu0
        %v2026 = vadd.f32 %v1862, %v2016
        %v2027 = vadd.f32 %v1864, %v2018
        %v2028 = vadd.f32 %v1868, %v2022
        %v2029 = vadd.f32 %v1870, %v2024
        %s2030 = scalar_lea.vmem [#allocation10], 4
        %v2031 = vld [vmem:[%s2030] sm:$0x3]
        %v2033 = vlaneseq
        %v2034 = vshrl.u32 %v2033, 7
        %v2035 = vsub.s32 0, %v2034
        %v2036 = vrot.slane %v2031, %v2035
        %v2037 = vlaneseq
        %v2038 = vshrl.u32 %v2037, 7
        %v2039 = vsub.s32 1, %v2038
        %v2040 = vrot.slane %v2031, %v2039
        %v2043 = vmul.f32 %v2026, %v2036
        %v2044 = vmul.f32 %v2027, %v2040
        %v2045 = vmul.f32 %v2028, %v2036
        %v2046 = vmul.f32 %v2029, %v2040
        %s2047 = scalar_lea.vmem [#allocation11], 4
        %v2048 = vld [vmem:[%s2047] sm:$0x3]
        %v2050 = vlaneseq
        %v2051 = vshrl.u32 %v2050, 7
        %v2052 = vsub.s32 0, %v2051
        %v2053 = vrot.slane %v2048, %v2052
        %v2054 = vlaneseq
        %v2055 = vshrl.u32 %v2054, 7
        %v2056 = vsub.s32 1, %v2055
        %v2057 = vrot.slane %v2048, %v2056
        %v2060 = vadd.f32 %v2043, %v2053
        %v2061 = vadd.f32 %v2044, %v2057
        %v2062 = vadd.f32 %v2045, %v2053
        %v2063 = vadd.f32 %v2046, %v2057
        %v2064 = vmax.f32 %v2060, 0.0
        %v2065 = vmax.f32 %v2061, 0.0
        %v2066 = vmax.f32 %v2062, 0.0
        %v2067 = vmax.f32 %v2063, 0.0
        %v2068 = vld [vmem:[#allocation13] sm:$0xff]
        %v2069 = vld [vmem:[#allocation13 + $0x8] sm:$0xff]
        %v2070 = vld [vmem:[#allocation13 + $0x10] sm:$0xff]
        %v2071 = vld [vmem:[#allocation13 + $0x18] sm:$0xff]
        %v2072 = vld [vmem:[#allocation13 + $0x20] sm:$0xff]
        %v2073 = vld [vmem:[#allocation13 + $0x28] sm:$0xff]
        %v2074 = vld [vmem:[#allocation13 + $0x30] sm:$0xff]
        %v2075 = vld [vmem:[#allocation13 + $0x38] sm:$0xff]
        %v2076 = vld [vmem:[#allocation13 + $0x40] sm:$0xff]
        %v2077 = vld [vmem:[#allocation13 + $0x48] sm:$0xff]
        %v2078 = vld [vmem:[#allocation13 + $0x50] sm:$0xff]
        %v2079 = vld [vmem:[#allocation13 + $0x58] sm:$0xff]
        %v2080 = vld [vmem:[#allocation13 + $0x60] sm:$0xff]
        %v2081 = vld [vmem:[#allocation13 + $0x68] sm:$0xff]
        %v2082 = vld [vmem:[#allocation13 + $0x70] sm:$0xff]
        %v2083 = vld [vmem:[#allocation13 + $0x78] sm:$0xff]
        %v2084 = vld [vmem:[#allocation13 + $0x80] sm:$0xff]
        %v2085 = vld [vmem:[#allocation13 + $0x88] sm:$0xff]
        %v2086 = vld [vmem:[#allocation13 + $0x90] sm:$0xff]
        %v2087 = vld [vmem:[#allocation13 + $0x98] sm:$0xff]
        %v2088 = vld [vmem:[#allocation13 + $0xa0] sm:$0xff]
        %v2089 = vld [vmem:[#allocation13 + $0xa8] sm:$0xff]
        %v2090 = vld [vmem:[#allocation13 + $0xb0] sm:$0xff]
        %v2091 = vld [vmem:[#allocation13 + $0xb8] sm:$0xff]
        %v2092 = vld [vmem:[#allocation13 + $0xc0] sm:$0xff]
        %v2093 = vld [vmem:[#allocation13 + $0xc8] sm:$0xff]
        %v2094 = vld [vmem:[#allocation13 + $0xd0] sm:$0xff]
        %v2095 = vld [vmem:[#allocation13 + $0xd8] sm:$0xff]
        %v2096 = vld [vmem:[#allocation13 + $0xe0] sm:$0xff]
        %v2097 = vld [vmem:[#allocation13 + $0xe8] sm:$0xff]
        %v2098 = vld [vmem:[#allocation13 + $0xf0] sm:$0xff]
        %v2099 = vld [vmem:[#allocation13 + $0xf8] sm:$0xff]
        %v2100 = vld [vmem:[#allocation14] sm:$0x1]
        %v2102 = vlaneseq
        %v2103 = vshrl.u32 %v2102, 7
        %v2104 = vsub.s32 0, %v2103
        %v2105 = vrot.slane %v2100, %v2104
        %2107 = vmatprep.subr.mxu0 0.0
        %2108 = vmatpush1.msra.mxu0 %v2068
        %2109 = vmatprep.subr.mxu0 0.0
        %2110 = vmatpush1.msra.mxu0 %v2069
        %2111 = vmatprep.subr.mxu0 0.0
        %2112 = vmatpush1.msra.mxu0 %v2070
        %2113 = vmatprep.subr.mxu0 0.0
        %2114 = vmatpush1.msra.mxu0 %v2071
        %2115 = vmatprep.subr.mxu0 0.0
        %2116 = vmatpush1.msra.mxu0 %v2072
        %2117 = vmatprep.subr.mxu0 0.0
        %2118 = vmatpush1.msra.mxu0 %v2073
        %2119 = vmatprep.subr.mxu0 0.0
        %2120 = vmatpush1.msra.mxu0 %v2074
        %2121 = vmatprep.subr.mxu0 0.0
        %2122 = vmatpush1.msra.mxu0 %v2075
        %2123 = vmatprep.subr.mxu0 0.0
        %2124 = vmatpush1.msra.mxu0 %v2076
        %2125 = vmatprep.subr.mxu0 0.0
        %2126 = vmatpush1.msra.mxu0 %v2077
        %2127 = vmatprep.subr.mxu0 0.0
        %2128 = vmatpush1.msra.mxu0 %v2078
        %2129 = vmatprep.subr.mxu0 0.0
        %2130 = vmatpush1.msra.mxu0 %v2079
        %2131 = vmatprep.subr.mxu0 0.0
        %2132 = vmatpush1.msra.mxu0 %v2080
        %2133 = vmatprep.subr.mxu0 0.0
        %2134 = vmatpush1.msra.mxu0 %v2081
        %2135 = vmatprep.subr.mxu0 0.0
        %2136 = vmatpush1.msra.mxu0 %v2082
        %2137 = vmatprep.subr.mxu0 0.0
        %2138 = vmatpush1.msra.mxu0 %v2083
        %2139 = vmatprep.subr.mxu0 0.0
        %2140 = vmatpush1.msra.mxu0 %v2084
        %2141 = vmatprep.subr.mxu0 0.0
        %2142 = vmatpush1.msra.mxu0 %v2085
        %2143 = vmatprep.subr.mxu0 0.0
        %2144 = vmatpush1.msra.mxu0 %v2086
        %2145 = vmatprep.subr.mxu0 0.0
        %2146 = vmatpush1.msra.mxu0 %v2087
        %2147 = vmatprep.subr.mxu0 0.0
        %2148 = vmatpush1.msra.mxu0 %v2088
        %2149 = vmatprep.subr.mxu0 0.0
        %2150 = vmatpush1.msra.mxu0 %v2089
        %2151 = vmatprep.subr.mxu0 0.0
        %2152 = vmatpush1.msra.mxu0 %v2090
        %2153 = vmatprep.subr.mxu0 0.0
        %2154 = vmatpush1.msra.mxu0 %v2091
        %2155 = vmatprep.subr.mxu0 0.0
        %2156 = vmatpush1.msra.mxu0 %v2092
        %2157 = vmatprep.subr.mxu0 0.0
        %2158 = vmatpush1.msra.mxu0 %v2093
        %2159 = vmatprep.subr.mxu0 0.0
        %2160 = vmatpush1.msra.mxu0 %v2094
        %2161 = vmatprep.subr.mxu0 0.0
        %2162 = vmatpush1.msra.mxu0 %v2095
        %2163 = vmatprep.subr.mxu0 0.0
        %2164 = vmatpush1.msra.mxu0 %v2096
        %2165 = vmatprep.subr.mxu0 0.0
        %2166 = vmatpush1.msra.mxu0 %v2097
        %2167 = vmatprep.subr.mxu0 0.0
        %2168 = vmatpush1.msra.mxu0 %v2098
        %2169 = vmatprep.subr.mxu0 0.0
        %2170 = vmatpush1.msra.mxu0 %v2099
        %2171 = vmatprep.mubr.f32.mxu0 %v2065
        %2172 = vmatmul.mubr.f32.gmra.mrb[0].mxu0 %v2064
        %v2173 = vpop.f32.mrb[0].mxu0
        %v2174 = vadd.f32 %v2105, %v2173
        %v2175 = vpop.f32.mrb[0].mxu0
        %2176 = vmatprep.mubr.f32.mxu0 %v2067
        %2177 = vmatmul.mubr.f32.gmra.mrb[0].mxu0 %v2066
        %v2178 = vpop.f32.mrb[0].mxu0
        %v2179 = vadd.f32 %v2105, %v2178
        %v2180 = vpop.f32.mrb[0].mxu0
        %2181 = vdwg.mxu0
        %2182 = vst [vmem:[%s421] sm:$0xff] %v2174
        %2183 = vst [vmem:[%s421 + $0x8] sm:$0xff] %v2179
        %s2184 = sand.u32 %s210, 1
        %s2185 = scalar_lea.sflag [#allocation4], %s2184
        %s2186 = sand.u32 %s210, 1
        %s2187 = smul.addr %s2186, 16
        %s2188 = scalar_lea.vmem [#allocation16], %s2187
        // Predicated region
        $region85: #{tpu_custom_call.1} parent=51 // pred_check
          %p2189 = pneg %p220
        $region86: #{tpu_custom_call.1} parent=51 // pred_check_branch
          %2191 = sbr.rel (%p2189) target = $region88
        $region87: #{tpu_custom_call.1} parent=51 // pred_region
          %s2193 = ssub.s32 256, 256
          %2194 = vsyncadd %s2185, %s2193
          %s2195 = smul.addr %s29, 2
          %s2196 = smul.addr %s2195, 128
          %s2197 = scalar_lea.hbm %s8, %s2196
          %s2198 = sshll.u32 %s2188, 4
          %s2199 = int_to_ptr.vmem [resolvable:$true] %s2198
          %2204 = dma.vmem_to_hbm [thread:$0]  %s2199, 256, %s2197, %s2185, 128, 128, 8
        $region88: #{tpu_custom_call.1} parent=51 // pred_fallthru
          _
      $region52: #{tpu_custom_call.1} parent=5 // pred_fallthru
        _
      %p2205 = scmp.le.s32.totalorder 2, %s24
      // Predicated region
      $region89: #{tpu_custom_call.1} parent=5 // pred_check
        %p2206 = pneg %p2205
      $region90: #{tpu_custom_call.1} parent=5 // pred_check_branch
        %2208 = sbr.rel (%p2206) target = $region92
      $region91: #{tpu_custom_call.1} parent=5 // pred_region
        %s2209 = ssub.s32 %s24, 2
        // Predicated region
        $region93: #{tpu_custom_call.1} parent=91 // pred_check
          %p2210 = pneg %p226
        $region94: #{tpu_custom_call.1} parent=91 // pred_check_branch
          %2212 = sbr.rel (%p2210) target = $region96
        $region95: #{tpu_custom_call.1} parent=91 // pred_region
          %s2213 = sand.u32 %s211, 1
          %s2214 = scalar_lea.sflag [#allocation4], %s2213
          %s2215 = sand.u32 %s211, 1
          %s2216 = smul.addr %s2215, 16
          %s2217 = scalar_lea.vmem [#allocation16], %s2216
          %2218 = dma.done %s2214, 256
        $region96: #{tpu_custom_call.1} parent=91 // pred_fallthru
          _
      $region92: #{tpu_custom_call.1} parent=5 // pred_fallthru
        _
    $region6: #{tpu_custom_call.1} parent=1 // loop_footer
      %s28 = sadd.s32 1, %s24
    $region7: #{tpu_custom_call.1} parent=1 // loop_footer_branch
      %23 = sbr.rel target = $region3
    $region8: #{tpu_custom_call.1} parent=1 // loop_exit
      _
    %2219 = vsyncpa [#allocation3], 1
    %s2220 = scalar_lea.sflag [#allocation3], 1
    %2221 = vsyncpa %s2220, 1
    %2222 = vsyncpa [#allocation6], 1
    %2223 = vsyncpa [#allocation9], 1
    %2224 = vsyncpa [#allocation12], 1
    %2225 = vsyncpa [#allocation15], 1
    %2226 = vsyncpa [#allocation4], 1
    %s2227 = scalar_lea.sflag [#allocation4], 1
    %2228 = vsyncpa %s2227, 1

</llo_original>
